<compile_context>
chip_gen: v6e
topology: v6e:2x2x1
jax: 0.10.0
libtpu: 0.0.40
codegen_flags: <defaults>
</compile_context>

<pallas_src>
import jax
import jax.numpy as jnp
from jax import lax
from jax.experimental import pallas as pl
from jax.experimental.pallas import tpu as pltpu

NEG_BIG = -1e30   # bias for padded vocab columns; exp() underflows to exactly 0
LANE = 128


def ngram_kernel(ids_ref, t_ref, b1_ref, w2_ref, b2_ref,
                 logits_ref, lse_ref, h_sc, m_sc, l_sc):
    # ids_ref   : (tile_m, context)          int32 token ids  (precondition: < vocab)
    # t_ref     : (context*128pad, hidden)   bf16   stacked precomputed E @ W1[c]
    # b1_ref    : (1, hidden)                f32
    # w2_ref    : (hidden, tile_v)           bf16
    # b2_ref    : (1, tile_v)                f32   (NEG_BIG on padded vocab cols)
    # logits_ref: (tile_m, tile_v)           f32   raw logits tile
    # lse_ref   : (tile_m, 1)                f32   written on last vocab step
    # h_sc      : (tile_m, hidden)           bf16  scratch, persists over vocab axis
    # m_sc, l_sc: (tile_m, 1)                f32   online-logsumexp state
    j = pl.program_id(1)
    nv = pl.num_programs(1)
    tile_m, context_size = ids_ref.shape
    k_dim = t_ref.shape[0]
    emb_rows_pad = k_dim // context_size

    # --- fused embedding gather + Linear1 + ReLU, once per batch tile ---
    @pl.when(j == 0)
    def _():
        ids = ids_ref[...]
        col = lax.broadcasted_iota(jnp.int32, (tile_m, k_dim), 1)
        # one-hot over the stacked table: column c*emb_rows_pad + ids[:, c]
        match = col == ids[:, 0:1]
        for c in range(1, context_size):
            match = match | (col == (ids[:, c:c + 1] + c * emb_rows_pad))
        onehot = match.astype(jnp.bfloat16)                       # (tile_m, K=ctx*128)
        h = jnp.dot(onehot, t_ref[...],
                    preferred_element_type=jnp.float32) + b1_ref[...]
        h_sc[...] = jnp.maximum(h, 0.0).astype(h_sc.dtype)
        m_sc[...] = jnp.full_like(m_sc, -jnp.inf)
        l_sc[...] = jnp.zeros_like(l_sc)

    # --- Linear2 on this vocab tile ---
    logits = jnp.dot(h_sc[...], w2_ref[...],
                     preferred_element_type=jnp.float32) + b2_ref[...]
    logits_ref[...] = logits

    # --- online logsumexp across vocab tiles (f32) ---
    m_new = jnp.maximum(m_sc[...], jnp.max(logits, axis=-1, keepdims=True))
    l_sc[...] = (l_sc[...] * jnp.exp(m_sc[...] - m_new)
                 + jnp.sum(jnp.exp(logits - m_new), axis=-1, keepdims=True))
    m_sc[...] = m_new

    @pl.when(j == nv - 1)
    def _():
        lse_ref[...] = m_sc[...] + jnp.log(l_sc[...])


def prepare_params(emb_table, w1, b1, w2, b2, *, tile_v=512):
    """One-time layout prep (NOT in the per-call hot path): precompute the
    stacked gather table T, transpose/pad/cast weights, pad vocab to a
    lane-dense multiple of tile_v with NEG_BIG bias on the pad columns."""
    vocab_size, embedding_dim = emb_table.shape
    hidden, in_features = w1.shape
    context_size = in_features // embedding_dim

    # Embedding rows padded to 128 -> aligned contraction K = context * 128.
    emb_rows_pad = max(LANE, pl.cdiv(vocab_size, LANE) * LANE)
    emb_pad = (jnp.zeros((emb_rows_pad, embedding_dim), jnp.float32)
               .at[:vocab_size, :].set(emb_table.astype(jnp.float32)))

    # T[c] = E_pad @ W1[c]  (f32 accumulate, stored bf16), stacked to (ctx*128, H).
    w1_slots = w1.astype(jnp.float32).T.reshape(context_size, embedding_dim, hidden)
    t_stacked = jnp.einsum("vd,cdh->cvh", emb_pad, w1_slots)
    t_stacked = t_stacked.reshape(context_size * emb_rows_pad, hidden).astype(jnp.bfloat16)

    # Output vocab padded to a multiple of the vocab tile.
    tile_v = max(LANE, (tile_v // LANE) * LANE)
    tile_v = min(tile_v, pl.cdiv(vocab_size, LANE) * LANE)
    vocab_pad = pl.cdiv(vocab_size, tile_v) * tile_v

    w2_t = (jnp.zeros((hidden, vocab_pad), jnp.float32)
            .at[:, :vocab_size].set(w2.astype(jnp.float32).T))
    b2_pad = (jnp.full((1, vocab_pad), NEG_BIG, jnp.float32)
              .at[0, :vocab_size].set(b2.astype(jnp.float32)))

    return dict(
        t=t_stacked,
        b1=b1.reshape(1, hidden).astype(jnp.float32),
        w2_t=w2_t.astype(jnp.bfloat16),
        b2=b2_pad,
        vocab_size=vocab_size,
        vocab_pad=vocab_pad,
        tile_v=tile_v,
        context_size=context_size,
        hidden=hidden,
    )


def ngram_forward(token_ids, params, *, tile_m=128):
    """token_ids: int32 (batch, context_size) -> log-probs (batch, vocab)."""
    batch, context_size = token_ids.shape
    assert context_size == params["context_size"]
    vocab_size = params["vocab_size"]
    vocab_pad = params["vocab_pad"]
    tile_v = params["tile_v"]
    hidden = params["hidden"]
    k_dim = params["t"].shape[0]

    # Keep tile_m a multiple of 8 (sublanes) and never (much) bigger than batch.
    tile_m = max(8, min(tile_m, pl.cdiv(batch, 8) * 8))
    batch_pad = pl.cdiv(batch, tile_m) * tile_m
    token_ids = token_ids.astype(jnp.int32)
    if batch_pad != batch:
        token_ids = (jnp.zeros((batch_pad, context_size), jnp.int32)
                     .at[:batch].set(token_ids))

    n_bt = batch_pad // tile_m
    n_vt = vocab_pad // tile_v

    full = lambda a: pl.BlockSpec(a.shape, lambda i, j: (0,) * a.ndim)

    cost = pl.CostEstimate(
        flops=2 * batch_pad * (k_dim * hidden + hidden * vocab_pad),
        transcendentals=batch_pad * vocab_pad,
        bytes_accessed=(token_ids.size * 4 + params["t"].size * 2 + hidden * 4
                        + params["w2_t"].size * 2 + vocab_pad * 4
                        + batch_pad * vocab_pad * 4 + batch_pad * 4),
    )

    logits, lse = pl.pallas_call(
        ngram_kernel,
        out_shape=(jax.ShapeDtypeStruct((batch_pad, vocab_pad), jnp.float32),
                   jax.ShapeDtypeStruct((batch_pad, 1), jnp.float32)),
        grid_spec=pltpu.PrefetchScalarGridSpec(
            num_scalar_prefetch=0,
            grid=(n_bt, n_vt),                       # vocab (reduction-like) axis last
            in_specs=[
                pl.BlockSpec((tile_m, context_size), lambda i, j: (i, 0)),
                full(params["t"]),
                full(params["b1"]),
                pl.BlockSpec((hidden, tile_v), lambda i, j: (0, j)),
                pl.BlockSpec((1, tile_v), lambda i, j: (0, j)),
            ],
            out_specs=[
                pl.BlockSpec((tile_m, tile_v), lambda i, j: (i, j)),
                pl.BlockSpec((tile_m, 1), lambda i, j: (i, 0)),
            ],
            scratch_shapes=[
                pltpu.VMEM((tile_m, hidden), jnp.bfloat16),   # h, reused over vocab axis
                pltpu.VMEM((tile_m, 1), jnp.float32),         # running max
                pltpu.VMEM((tile_m, 1), jnp.float32),         # running sum-exp
            ]),
        compiler_params=pltpu.CompilerParams(
            # batch axis split across TCs on v7x; vocab axis carries scratch state.
            dimension_semantics=("parallel", "arbitrary")),
        cost_estimate=cost,
    )(token_ids, params["t"], params["b1"], params["w2_t"], params["b2"])

    # Final log_softmax: trivial broadcast-subtract, padded rows/cols sliced off.
    return logits[:batch, :vocab_size] - lse[:batch]


def reference_forward(token_ids, emb_table, w1, b1, w2, b2):
    batch, ctx = token_ids.shape
    d = emb_table.shape[1]
    x = jnp.take(emb_table, token_ids.reshape(-1), axis=0).reshape(batch, ctx * d)
    h = jnp.maximum(x @ w1.T + b1, 0.0)
    logits = h @ w2.T + b2
    return jax.nn.log_softmax(logits, axis=-1)


if __name__ == "__main__":
    VOCAB_SIZE = 49
    EMBEDDING_DIM = 10
    CONTEXT_SIZE = 2
    HIDDEN = 128
    BATCH = 200   # > tile_m and not a multiple of it -> exercises tiling + padding

    key = jax.random.PRNGKey(0)
    k_emb, k_w1, k_b1, k_w2, k_b2, k_in = jax.random.split(key, 6)

    emb_table = jax.random.normal(k_emb, (VOCAB_SIZE, EMBEDDING_DIM), jnp.float32)
    w1 = jax.random.normal(k_w1, (HIDDEN, CONTEXT_SIZE * EMBEDDING_DIM), jnp.float32) * 0.1
    b1 = jax.random.normal(k_b1, (HIDDEN,), jnp.float32) * 0.1
    w2 = jax.random.normal(k_w2, (VOCAB_SIZE, HIDDEN), jnp.float32) * 0.1
    b2 = jax.random.normal(k_b2, (VOCAB_SIZE,), jnp.float32) * 0.1

    token_ids = jax.random.randint(k_in, (BATCH, CONTEXT_SIZE), 0, VOCAB_SIZE, jnp.int32)

    params = prepare_params(emb_table, w1, b1, w2, b2, tile_v=512)  # one-time prep
    log_probs = ngram_forward(token_ids, params, tile_m=128)
    jax.block_until_ready(log_probs)

    ref = reference_forward(token_ids, emb_table, w1, b1, w2, b2)
    assert log_probs.shape == (BATCH, VOCAB_SIZE)
    # bf16 matmul operands (f32 accumulate) -> loose tolerance vs. pure-f32 ref.
    assert jnp.allclose(log_probs, ref, atol=5e-2, rtol=5e-2), \
        float(jnp.max(jnp.abs(log_probs - ref)))
    # log_softmax sanity: each row's probabilities sum to 1.
    assert jnp.allclose(jnp.sum(jnp.exp(log_probs), axis=-1), 1.0, atol=1e-3)

    print("KERNEL_OK")
</pallas_src>

<mosaic_0001>
module attributes {stable_mosaic.version = 11 : i64} {
  func.func @ngram_kernel(%arg0: i32, %arg1: i32, %arg2: memref<128x2xi32, #tpu.memory_space<vmem>>, %arg3: memref<256x128xbf16, #tpu.memory_space<vmem>>, %arg4: memref<1x128xf32, #tpu.memory_space<vmem>>, %arg5: memref<128x128xbf16, #tpu.memory_space<vmem>>, %arg6: memref<1x128xf32, #tpu.memory_space<vmem>>, %arg7: memref<128x128xf32, #tpu.memory_space<vmem>>, %arg8: memref<128x1xf32, #tpu.memory_space<vmem>>, %arg9: memref<128x128xbf16, #tpu.memory_space<vmem>>, %arg10: memref<128x1xf32, #tpu.memory_space<vmem>>, %arg11: memref<128x1xf32, #tpu.memory_space<vmem>>) attributes {dimension_semantics = [#tpu.dimension_semantics<parallel>, #tpu.dimension_semantics<arbitrary>], iteration_bounds = array<i64: 2, 1>, scalar_prefetch = 0 : i64, scratch_operands = 3 : i64, tpu.core_type = #tpu.core_type<tc>, window_params = [{transform_indices = @transform_0, window_bounds = array<i64: 128, 2>}, {pipeline_mode = #tpu.pipeline_mode<synchronous>, transform_indices = @transform_1, window_bounds = array<i64: 256, 128>}, {pipeline_mode = #tpu.pipeline_mode<synchronous>, transform_indices = @transform_2, window_bounds = array<i64: 1, 128>}, {transform_indices = @transform_3, window_bounds = array<i64: 128, 128>}, {transform_indices = @transform_4, window_bounds = array<i64: 1, 128>}, {transform_indices = @transform_5, window_bounds = array<i64: 128, 128>}, {transform_indices = @transform_6, window_bounds = array<i64: 128, 1>}]} {
    %c0_i32 = arith.constant 0 : i32
    %0 = arith.cmpi eq, %arg1, %c0_i32 : i32
    %1 = arith.extui %0 : i1 to i32
    %c0_i32_0 = arith.constant 0 : i32
    %2 = arith.cmpi ne, %1, %c0_i32_0 : i32
    scf.if %2 {
      %c0_22 = arith.constant 0 : index
      %c0_23 = arith.constant 0 : index
      %30 = vector.load %arg2[%c0_22, %c0_23] : memref<128x2xi32, #tpu.memory_space<vmem>>, vector<128x2xi32>
      %31 = tpu.iota {dimensions = array<i32: 1>} : vector<128x256xi32>
      %32 = vector.extract_strided_slice %30 {offsets = [0, 0], sizes = [128, 1], strides = [1, 1]} : vector<128x2xi32> to vector<128x1xi32>
      %33 = vector.broadcast %32 : vector<128x1xi32> to vector<128x256xi32>
      %34 = arith.cmpi eq, %31, %33 : vector<128x256xi32>
      %35 = vector.extract_strided_slice %30 {offsets = [0, 1], sizes = [128, 1], strides = [1, 1]} : vector<128x2xi32> to vector<128x1xi32>
      %c128_i32 = arith.constant 128 : i32
      %36 = vector.broadcast %c128_i32 : i32 to vector<128x1xi32>
      %37 = arith.addi %35, %36 : vector<128x1xi32>
      %38 = vector.broadcast %37 : vector<128x1xi32> to vector<128x256xi32>
      %39 = arith.cmpi eq, %31, %38 : vector<128x256xi32>
      %40 = arith.ori %34, %39 : vector<128x256xi1>
      %41 = arith.extui %40 : vector<128x256xi1> to vector<128x256xi32>
      %42 = arith.sitofp %41 : vector<128x256xi32> to vector<128x256xf32>
      %43 = arith.truncf %42 : vector<128x256xf32> to vector<128x256xbf16>
      %c0_24 = arith.constant 0 : index
      %c0_25 = arith.constant 0 : index
      %44 = vector.load %arg3[%c0_24, %c0_25] : memref<256x128xbf16, #tpu.memory_space<vmem>>, vector<256x128xbf16>
      %cst_26 = arith.constant dense<0.000000e+00> : vector<128x128xf32>
      %45 = tpu.matmul %43, %44, %cst_26 {dimension_numbers = #tpu.dot_dimension_numbers<[1], [0], [0], [1], [0, 0, 1, 1], [], []>} : vector<128x256xbf16>, vector<256x128xbf16>, vector<128x128xf32> -> vector<128x128xf32>
      %c0_27 = arith.constant 0 : index
      %c0_28 = arith.constant 0 : index
      %46 = vector.load %arg4[%c0_27, %c0_28] : memref<1x128xf32, #tpu.memory_space<vmem>>, vector<1x128xf32>
      %47 = vector.broadcast %46 : vector<1x128xf32> to vector<128x128xf32>
      %48 = arith.addf %45, %47 : vector<128x128xf32>
      %cst_29 = arith.constant 0.000000e+00 : f32
      %49 = vector.broadcast %cst_29 : f32 to vector<128x128xf32>
      %50 = arith.maximumf %48, %49 : vector<128x128xf32>
      %51 = arith.truncf %50 : vector<128x128xf32> to vector<128x128xbf16>
      %c0_30 = arith.constant 0 : index
      %c0_31 = arith.constant 0 : index
      %52 = vector.load %arg9[%c0_30, %c0_31] : memref<128x128xbf16, #tpu.memory_space<vmem>>, vector<128x128xbf16>
      tpu.vector_store %arg9[%c0_30, %c0_31], %51 {strides = array<i32>} : memref<128x128xbf16, #tpu.memory_space<vmem>>, vector<128x128xbf16>,
      %cst_32 = arith.constant 0xFF800000 : f32
      %53 = vector.broadcast %cst_32 : f32 to vector<128x1xf32>
      %c0_33 = arith.constant 0 : index
      %c0_34 = arith.constant 0 : index
      %54 = vector.load %arg10[%c0_33, %c0_34] : memref<128x1xf32, #tpu.memory_space<vmem>>, vector<128x1xf32>
      tpu.vector_store %arg10[%c0_33, %c0_34], %53 {strides = array<i32>} : memref<128x1xf32, #tpu.memory_space<vmem>>, vector<128x1xf32>,
      %cst_35 = arith.constant 0.000000e+00 : f32
      %55 = vector.broadcast %cst_35 : f32 to vector<128x1xf32>
      %c0_36 = arith.constant 0 : index
      %c0_37 = arith.constant 0 : index
      %56 = vector.load %arg11[%c0_36, %c0_37] : memref<128x1xf32, #tpu.memory_space<vmem>>, vector<128x1xf32>
      tpu.vector_store %arg11[%c0_36, %c0_37], %55 {strides = array<i32>} : memref<128x1xf32, #tpu.memory_space<vmem>>, vector<128x1xf32>,
    } else {
    }
    %c0 = arith.constant 0 : index
    %c0_1 = arith.constant 0 : index
    %3 = vector.load %arg9[%c0, %c0_1] : memref<128x128xbf16, #tpu.memory_space<vmem>>, vector<128x128xbf16>
    %c0_2 = arith.constant 0 : index
    %c0_3 = arith.constant 0 : index
    %4 = vector.load %arg5[%c0_2, %c0_3] : memref<128x128xbf16, #tpu.memory_space<vmem>>, vector<128x128xbf16>
    %cst = arith.constant dense<0.000000e+00> : vector<128x128xf32>
    %5 = tpu.matmul %3, %4, %cst {dimension_numbers = #tpu.dot_dimension_numbers<[1], [0], [0], [1], [0, 0, 1, 1], [], []>} : vector<128x128xbf16>, vector<128x128xbf16>, vector<128x128xf32> -> vector<128x128xf32>
    %c0_4 = arith.constant 0 : index
    %c0_5 = arith.constant 0 : index
    %6 = vector.load %arg6[%c0_4, %c0_5] : memref<1x128xf32, #tpu.memory_space<vmem>>, vector<1x128xf32>
    %7 = vector.broadcast %6 : vector<1x128xf32> to vector<128x128xf32>
    %8 = arith.addf %5, %7 : vector<128x128xf32>
    %c0_6 = arith.constant 0 : index
    %c0_7 = arith.constant 0 : index
    %9 = vector.load %arg7[%c0_6, %c0_7] : memref<128x128xf32, #tpu.memory_space<vmem>>, vector<128x128xf32>
    tpu.vector_store %arg7[%c0_6, %c0_7], %8 {strides = array<i32>} : memref<128x128xf32, #tpu.memory_space<vmem>>, vector<128x128xf32>,
    %c0_8 = arith.constant 0 : index
    %c0_9 = arith.constant 0 : index
    %10 = vector.load %arg10[%c0_8, %c0_9] : memref<128x1xf32, #tpu.memory_space<vmem>>, vector<128x1xf32>
    %cst_10 = arith.constant dense<0xFF800000> : vector<128xf32>
    %11 = vector.multi_reduction <maximumf>, %8, %cst_10 [1] : vector<128x128xf32> to vector<128xf32>
    %12 = vector.shape_cast %11 : vector<128xf32> to vector<128x1xf32>
    %13 = arith.maximumf %10, %12 : vector<128x1xf32>
    %c0_11 = arith.constant 0 : index
    %c0_12 = arith.constant 0 : index
    %14 = vector.load %arg11[%c0_11, %c0_12] : memref<128x1xf32, #tpu.memory_space<vmem>>, vector<128x1xf32>
    %c0_13 = arith.constant 0 : index
    %c0_14 = arith.constant 0 : index
    %15 = vector.load %arg10[%c0_13, %c0_14] : memref<128x1xf32, #tpu.memory_space<vmem>>, vector<128x1xf32>
    %16 = arith.subf %15, %13 : vector<128x1xf32>
    %17 = math.exp %16 : vector<128x1xf32>
    %18 = arith.mulf %14, %17 : vector<128x1xf32>
    %19 = vector.broadcast %13 : vector<128x1xf32> to vector<128x128xf32>
    %20 = arith.subf %8, %19 : vector<128x128xf32>
    %21 = math.exp %20 : vector<128x128xf32>
    %cst_15 = arith.constant dense<0.000000e+00> : vector<128xf32>
    %22 = vector.multi_reduction <add>, %21, %cst_15 [1] : vector<128x128xf32> to vector<128xf32>
    %23 = vector.shape_cast %22 : vector<128xf32> to vector<128x1xf32>
    %24 = arith.addf %18, %23 : vector<128x1xf32>
    %c0_16 = arith.constant 0 : index
    %c0_17 = arith.constant 0 : index
    %25 = vector.load %arg11[%c0_16, %c0_17] : memref<128x1xf32, #tpu.memory_space<vmem>>, vector<128x1xf32>
    tpu.vector_store %arg11[%c0_16, %c0_17], %24 {strides = array<i32>} : memref<128x1xf32, #tpu.memory_space<vmem>>, vector<128x1xf32>,
    %c0_18 = arith.constant 0 : index
    %c0_19 = arith.constant 0 : index
    %26 = vector.load %arg10[%c0_18, %c0_19] : memref<128x1xf32, #tpu.memory_space<vmem>>, vector<128x1xf32>
    tpu.vector_store %arg10[%c0_18, %c0_19], %13 {strides = array<i32>} : memref<128x1xf32, #tpu.memory_space<vmem>>, vector<128x1xf32>,
    %c0_i32_20 = arith.constant 0 : i32
    %27 = arith.cmpi eq, %arg1, %c0_i32_20 : i32
    %28 = arith.extui %27 : i1 to i32
    %c0_i32_21 = arith.constant 0 : i32
    %29 = arith.cmpi ne, %28, %c0_i32_21 : i32
    scf.if %29 {
      %c0_22 = arith.constant 0 : index
      %c0_23 = arith.constant 0 : index
      %30 = vector.load %arg10[%c0_22, %c0_23] : memref<128x1xf32, #tpu.memory_space<vmem>>, vector<128x1xf32>
      %c0_24 = arith.constant 0 : index
      %c0_25 = arith.constant 0 : index
      %31 = vector.load %arg11[%c0_24, %c0_25] : memref<128x1xf32, #tpu.memory_space<vmem>>, vector<128x1xf32>
      %32 = math.log %31 : vector<128x1xf32>
      %33 = arith.addf %30, %32 : vector<128x1xf32>
      %c0_26 = arith.constant 0 : index
      %c0_27 = arith.constant 0 : index
      %34 = vector.load %arg8[%c0_26, %c0_27] : memref<128x1xf32, #tpu.memory_space<vmem>>, vector<128x1xf32>
      tpu.vector_store %arg8[%c0_26, %c0_27], %33 {strides = array<i32>} : memref<128x1xf32, #tpu.memory_space<vmem>>, vector<128x1xf32>,
    } else {
    }
    return
  }
  func.func @transform_0(%arg0: i32, %arg1: i32) -> (i32, i32) {
    %c0_i32 = arith.constant 0 : i32
    %c0_i32_0 = arith.constant 0 : i32
    return %arg0, %c0_i32 : i32, i32
  }
  func.func @transform_1(%arg0: i32, %arg1: i32) -> (i32, i32) {
    %c0_i32 = arith.constant 0 : i32
    %c0_i32_0 = arith.constant 0 : i32
    %c0_i32_1 = arith.constant 0 : i32
    return %c0_i32, %c0_i32_0 : i32, i32
  }
  func.func @transform_2(%arg0: i32, %arg1: i32) -> (i32, i32) {
    %c0_i32 = arith.constant 0 : i32
    %c0_i32_0 = arith.constant 0 : i32
    %c0_i32_1 = arith.constant 0 : i32
    return %c0_i32, %c0_i32_0 : i32, i32
  }
  func.func @transform_3(%arg0: i32, %arg1: i32) -> (i32, i32) {
    %c0_i32 = arith.constant 0 : i32
    %c0_i32_0 = arith.constant 0 : i32
    return %c0_i32, %arg1 : i32, i32
  }
  func.func @transform_4(%arg0: i32, %arg1: i32) -> (i32, i32) {
    %c0_i32 = arith.constant 0 : i32
    %c0_i32_0 = arith.constant 0 : i32
    return %c0_i32, %arg1 : i32, i32
  }
  func.func @transform_5(%arg0: i32, %arg1: i32) -> (i32, i32) {
    %c0_i32 = arith.constant 0 : i32
    return %arg0, %arg1 : i32, i32
  }
  func.func @transform_6(%arg0: i32, %arg1: i32) -> (i32, i32) {
    %c0_i32 = arith.constant 0 : i32
    %c0_i32_0 = arith.constant 0 : i32
    return %arg0, %c0_i32 : i32, i32
  }
}

</mosaic_0001>

<llo_original>
// kernel: tpu_custom_call.1
$region0: #{tpu_custom_call.1}
  #allocation0 [shape = 'u32[]', space=smem, size = 0x4, offset = 0x4, fixed_abs, tag = 'smem constant byte address 0x4 - core index']
  #allocation1 [shape = 'u32[144,128]{1,0:T(1,128)}', space=vmem, size = 0x12000, scoped, tag = 'internal scratch']
  #allocation2 [shape = 'bf16[128,128]{1,0:T(8,128)(2,1)}', space=vmem, size = 0x8000, scoped, tag = 'scratch operand']
  #allocation3 [shape = 'f32[128,1]{1,0:T(8,128)}', space=vmem, size = 0x10000, scoped, tag = 'scratch operand']
  #allocation4 [shape = 'f32[128,1]{1,0:T(8,128)}', space=vmem, size = 0x10000, scoped, tag = 'scratch operand']
  %s0 = inlined_call_operand.vmem [shape: s32[256,2], index: 0, kind: input, shape index: {}]
  %s1 = inlined_call_operand.vmem [shape: bf16[256,128], index: 1, kind: input, shape index: {}]
  %s2 = inlined_call_operand.vmem [shape: f32[1,128], index: 2, kind: input, shape index: {}]
  %s3 = inlined_call_operand.vmem [shape: bf16[128,128], index: 3, kind: input, shape index: {}]
  %s4 = inlined_call_operand.vmem [shape: f32[1,128], index: 4, kind: input, shape index: {}]
  %s5 = inlined_call_operand.hbm [shape: f32[256,128], index: 5, kind: output, shape index: {0}]
  %s6 = inlined_call_operand.vmem [shape: f32[256,1], index: 6, kind: output, shape index: {1}]
  %7 = xla_tuple %s5, %s6
  %s8 = sld [smem:[#allocation0]]
  $region69: #{tpu_custom_call.1} parent=0
    _
  %s10 = ssub.s32 1, %s8
  %s11 = scalar_select 0, %s10, %s8
  $region1: #{tpu_custom_call.1} parent=0
    #allocation5 [shape = 'u8[131072]{0}', space=vmem, size = 0x20000, scoped, tag = 'output window, operand 0']
    #allocation6 [shape = 's32[2]{0}', space=sflag, size = 0x8, scoped, tag = 'scoped memory for tpu_custom_call.1']
    %12 = vsyncpa [#allocation6], 0
    %s13 = scalar_lea.sflag [#allocation6], 1
    %14 = vsyncpa %s13, 0
    loop: start=0, step=1, limit=4
    $region2: #{tpu_custom_call.1} parent=1 // loop_pre_header
      _
    $region3: #{tpu_custom_call.1} parent=1 // loop_header
      %s16 = sphi 0, %s20
      %p17 = scmp.ge.s32.totalorder %s16, 4
      %s23 = sphi 0, %s35
      %s24 = sphi 0, %s31
      %s25 = sphi 0, %s23
      %s26 = sphi 0, %s24
      %s27 = sphi 0, %s25
      %s28 = sphi 0, %s26
      %s38 = sphi 0, %s40
      %s41 = sphi 0, %s38
      %s42 = sphi 0, %s41
      %s58 = sphi 0, %s42
      %s62 = sphi 0, %s62
      %s64 = sphi 0, %s62
      %s65 = sphi 0, %s64
      %s79 = sphi 0, %s65
      %s83 = sphi 0, %s83
      %s85 = sphi 0, %s83
      %s86 = sphi 0, %s85
      %s100 = sphi 0, %s86
      %s106 = sphi 0, %s108
      %s109 = sphi 0, %s106
      %s110 = sphi 0, %s109
      %s126 = sphi 0, %s110
      %s132 = sphi 0, %s134
      %s135 = sphi 0, %s132
      %s136 = sphi 0, %s135
      %s152 = sphi 0, %s136
      %s160 = sphi 0, %s162
      %s163 = sphi 0, %s160
      %s164 = sphi 0, %s163
      %s180 = sphi 0, %s164
      %s186 = sphi 0, %s188
      %s189 = sphi 0, %s186
      %s190 = sphi 0, %s189
      %s206 = sphi 0, %s190
    $region4: #{tpu_custom_call.1} parent=1 // loop_header_branch
      %19 = sbr.rel (%p17) target = $region8
    $region5: #{tpu_custom_call.1} parent=1 // loop_body
      %s21 = ssub.s32 %s16, 1
      %s22 = ssub.s32 %s16, 2
      %s29 = sadd.s32 1, %s24
      %p30 = scmp.ge.s32.totalorder %s29, 1
      %s31 = scalar_select %p30, 0, %s29
      %s32 = sadd.s32 1, %s23
      %s33 = scalar_select %p30, %s32, %s23
      %p34 = scmp.ge.s32.totalorder %s33, 2
      %s35 = scalar_select %p34, 0, %s33
      %s36 = ssub.s32 %s23, %s35
      %p37 = scmp.eq.s32.totalorder %s36, 0
      %s39 = sadd.s32 %s38, 1
      %s40 = scalar_select %p37, %s38, %s39
      %p43 = pneg %p37
      %p44 = scmp.eq.s32.totalorder %s16, 1
      %p45 = por %p43, %p44
      %p46 = scmp.ne.s32.totalorder %s38, %s41
      %p47 = scmp.eq.s32.totalorder %s16, 0
      %p48 = por %p46, %p47
      %p49 = scmp.ne.s32.totalorder %s38, %s41
      %p50 = scmp.eq.s32.totalorder %s21, 1
      %p51 = por %p49, %p50
      %p52 = scmp.ne.s32.totalorder %s41, %s42
      %p53 = scmp.eq.s32.totalorder %s21, 0
      %p54 = por %p52, %p53
      %p55 = scmp.ne.s32.totalorder %s41, %s42
      %p56 = scmp.eq.s32.totalorder %s22, 1
      %p57 = por %p55, %p56
      %p59 = scmp.ne.s32.totalorder %s42, %s58
      %p60 = scmp.eq.s32.totalorder %s22, 0
      %p61 = por %p59, %p60
      %s63 = sadd.s32 %s62, 1
      %p66 = scmp.eq.s32.totalorder %s16, 1
      %p67 = scmp.ne.s32.totalorder %s62, %s64
      %p68 = scmp.eq.s32.totalorder %s16, 0
      %p69 = por %p67, %p68
      %p70 = scmp.ne.s32.totalorder %s62, %s64
      %p71 = scmp.eq.s32.totalorder %s21, 1
      %p72 = por %p70, %p71
      %p73 = scmp.ne.s32.totalorder %s64, %s65
      %p74 = scmp.eq.s32.totalorder %s21, 0
      %p75 = por %p73, %p74
      %p76 = scmp.ne.s32.totalorder %s64, %s65
      %p77 = scmp.eq.s32.totalorder %s22, 1
      %p78 = por %p76, %p77
      %p80 = scmp.ne.s32.totalorder %s65, %s79
      %p81 = scmp.eq.s32.totalorder %s22, 0
      %p82 = por %p80, %p81
      %s84 = sadd.s32 %s83, 1
      %p87 = scmp.eq.s32.totalorder %s16, 1
      %p88 = scmp.ne.s32.totalorder %s83, %s85
      %p89 = scmp.eq.s32.totalorder %s16, 0
      %p90 = por %p88, %p89
      %p91 = scmp.ne.s32.totalorder %s83, %s85
      %p92 = scmp.eq.s32.totalorder %s21, 1
      %p93 = por %p91, %p92
      %p94 = scmp.ne.s32.totalorder %s85, %s86
      %p95 = scmp.eq.s32.totalorder %s21, 0
      %p96 = por %p94, %p95
      %p97 = scmp.ne.s32.totalorder %s85, %s86
      %p98 = scmp.eq.s32.totalorder %s22, 1
      %p99 = por %p97, %p98
      %p101 = scmp.ne.s32.totalorder %s86, %s100
      %p102 = scmp.eq.s32.totalorder %s22, 0
      %p103 = por %p101, %p102
      %s104 = ssub.s32 %s24, %s31
      %p105 = scmp.eq.s32.totalorder %s104, 0
      %s107 = sadd.s32 %s106, 1
      %s108 = scalar_select %p105, %s106, %s107
      %p111 = pneg %p105
      %p112 = scmp.eq.s32.totalorder %s16, 1
      %p113 = por %p111, %p112
      %p114 = scmp.ne.s32.totalorder %s106, %s109
      %p115 = scmp.eq.s32.totalorder %s16, 0
      %p116 = por %p114, %p115
      %p117 = scmp.ne.s32.totalorder %s106, %s109
      %p118 = scmp.eq.s32.totalorder %s21, 1
      %p119 = por %p117, %p118
      %p120 = scmp.ne.s32.totalorder %s109, %s110
      %p121 = scmp.eq.s32.totalorder %s21, 0
      %p122 = por %p120, %p121
      %p123 = scmp.ne.s32.totalorder %s109, %s110
      %p124 = scmp.eq.s32.totalorder %s22, 1
      %p125 = por %p123, %p124
      %p127 = scmp.ne.s32.totalorder %s110, %s126
      %p128 = scmp.eq.s32.totalorder %s22, 0
      %p129 = por %p127, %p128
      %s130 = ssub.s32 %s24, %s31
      %p131 = scmp.eq.s32.totalorder %s130, 0
      %s133 = sadd.s32 %s132, 1
      %s134 = scalar_select %p131, %s132, %s133
      %p137 = pneg %p131
      %p138 = scmp.eq.s32.totalorder %s16, 1
      %p139 = por %p137, %p138
      %p140 = scmp.ne.s32.totalorder %s132, %s135
      %p141 = scmp.eq.s32.totalorder %s16, 0
      %p142 = por %p140, %p141
      %p143 = scmp.ne.s32.totalorder %s132, %s135
      %p144 = scmp.eq.s32.totalorder %s21, 1
      %p145 = por %p143, %p144
      %p146 = scmp.ne.s32.totalorder %s135, %s136
      %p147 = scmp.eq.s32.totalorder %s21, 0
      %p148 = por %p146, %p147
      %p149 = scmp.ne.s32.totalorder %s135, %s136
      %p150 = scmp.eq.s32.totalorder %s22, 1
      %p151 = por %p149, %p150
      %p153 = scmp.ne.s32.totalorder %s136, %s152
      %p154 = scmp.eq.s32.totalorder %s22, 0
      %p155 = por %p153, %p154
      %s156 = ssub.s32 %s23, %s35
      %s157 = ssub.s32 %s24, %s31
      %s158 = sor.u32 %s156, %s157
      %p159 = scmp.eq.s32.totalorder %s158, 0
      %s161 = sadd.s32 %s160, 1
      %s162 = scalar_select %p159, %s160, %s161
      %p165 = pneg %p159
      %p166 = scmp.eq.s32.totalorder %s16, 1
      %p167 = por %p165, %p166
      %p168 = scmp.ne.s32.totalorder %s160, %s163
      %p169 = scmp.eq.s32.totalorder %s16, 0
      %p170 = por %p168, %p169
      %p171 = scmp.ne.s32.totalorder %s160, %s163
      %p172 = scmp.eq.s32.totalorder %s21, 1
      %p173 = por %p171, %p172
      %p174 = scmp.ne.s32.totalorder %s163, %s164
      %p175 = scmp.eq.s32.totalorder %s21, 0
      %p176 = por %p174, %p175
      %p177 = scmp.ne.s32.totalorder %s163, %s164
      %p178 = scmp.eq.s32.totalorder %s22, 1
      %p179 = por %p177, %p178
      %p181 = scmp.ne.s32.totalorder %s164, %s180
      %p182 = scmp.eq.s32.totalorder %s22, 0
      %p183 = por %p181, %p182
      %s184 = ssub.s32 %s23, %s35
      %p185 = scmp.eq.s32.totalorder %s184, 0
      %s187 = sadd.s32 %s186, 1
      %s188 = scalar_select %p185, %s186, %s187
      %p191 = pneg %p185
      %p192 = scmp.eq.s32.totalorder %s16, 1
      %p193 = por %p191, %p192
      %p194 = scmp.ne.s32.totalorder %s186, %s189
      %p195 = scmp.eq.s32.totalorder %s16, 0
      %p196 = por %p194, %p195
      %p197 = scmp.ne.s32.totalorder %s186, %s189
      %p198 = scmp.eq.s32.totalorder %s21, 1
      %p199 = por %p197, %p198
      %p200 = scmp.ne.s32.totalorder %s189, %s190
      %p201 = scmp.eq.s32.totalorder %s21, 0
      %p202 = por %p200, %p201
      %p203 = scmp.ne.s32.totalorder %s189, %s190
      %p204 = scmp.eq.s32.totalorder %s22, 1
      %p205 = por %p203, %p204
      %p207 = scmp.ne.s32.totalorder %s190, %s206
      %p208 = scmp.eq.s32.totalorder %s22, 0
      %p209 = por %p207, %p208
      %p210 = scmp.le.s32.totalorder 1, %s16
      %p211 = scmp.lt.s32.totalorder %s16, 3
      %p212 = pnand %p210, %p211
      %p213 = pneg %p212
      // Predicated region
      $region9: #{tpu_custom_call.1} parent=5 // pred_check
        _
      $region10: #{tpu_custom_call.1} parent=5 // pred_check_branch
        %215 = sbr.rel (%p212) target = $region12
      $region11: #{tpu_custom_call.1} parent=5 // pred_region
        %s216 = ssub.s32 %s16, 1
        // Predicated region
        $region13: #{tpu_custom_call.1} parent=11 // pred_check
          %p217 = pneg %p75
        $region14: #{tpu_custom_call.1} parent=11 // pred_check_branch
          %219 = sbr.rel (%p217) target = $region16
        $region15: #{tpu_custom_call.1} parent=11 // pred_region
          _
        $region16: #{tpu_custom_call.1} parent=11 // pred_fallthru
          _
        // Predicated region
        $region17: #{tpu_custom_call.1} parent=11 // pred_check
          %p220 = pneg %p96
        $region18: #{tpu_custom_call.1} parent=11 // pred_check_branch
          %222 = sbr.rel (%p220) target = $region20
        $region19: #{tpu_custom_call.1} parent=11 // pred_region
          _
        $region20: #{tpu_custom_call.1} parent=11 // pred_fallthru
          _
        // Predicated region
        $region21: #{tpu_custom_call.1} parent=11 // pred_check
          %p223 = pneg %p122
        $region22: #{tpu_custom_call.1} parent=11 // pred_check_branch
          %225 = sbr.rel (%p223) target = $region24
        $region23: #{tpu_custom_call.1} parent=11 // pred_region
          %p226 = scmp.lt.s32.totalorder %s26, 0
          %s227 = scalar_select %p226, %s26, 0
          %s228 = smul.addr %s227, 4
          %s229 = scalar_lea.vmem %s3, %s228
        $region24: #{tpu_custom_call.1} parent=11 // pred_fallthru
          _
        // Predicated region
        $region25: #{tpu_custom_call.1} parent=11 // pred_check
          %p230 = pneg %p148
        $region26: #{tpu_custom_call.1} parent=11 // pred_check_branch
          %232 = sbr.rel (%p230) target = $region28
        $region27: #{tpu_custom_call.1} parent=11 // pred_region
          %p233 = scmp.lt.s32.totalorder %s26, 0
          %s234 = scalar_select %p233, %s26, 0
          %s235 = scalar_lea.vmem %s4, %s234
        $region28: #{tpu_custom_call.1} parent=11 // pred_fallthru
          _
      $region12: #{tpu_custom_call.1} parent=5 // pred_fallthru
        _
      %p236 = scmp.lt.s32.totalorder %s16, 2
      // Predicated region
      $region29: #{tpu_custom_call.1} parent=5 // pred_check
        %p237 = pneg %p236
      $region30: #{tpu_custom_call.1} parent=5 // pred_check_branch
        %239 = sbr.rel (%p237) target = $region32
      $region31: #{tpu_custom_call.1} parent=5 // pred_region
        // Predicated region
        $region33: #{tpu_custom_call.1} parent=31 // pred_check
          %p240 = pneg %p48
        $region34: #{tpu_custom_call.1} parent=31 // pred_check_branch
          %242 = sbr.rel (%p240) target = $region36
        $region35: #{tpu_custom_call.1} parent=31 // pred_region
          %s243 = smul.u32 16, %s23
          %p244 = scmp.lt.s32.totalorder %s243, 31
          %s245 = scalar_select %p244, %s243, 31
          %s246 = smul.addr %s245, 8
          %s247 = scalar_lea.vmem %s0, %s246
          %s248 = smul.u32 16, %s23
        $region36: #{tpu_custom_call.1} parent=31 // pred_fallthru
          _
      $region32: #{tpu_custom_call.1} parent=5 // pred_fallthru
        _
      %p249 = scmp.le.s32.totalorder 1, %s16
      %p250 = scmp.lt.s32.totalorder %s16, 3
      %p251 = pnand %p249, %p250
      %p252 = pneg %p251
      // Predicated region
      $region37: #{tpu_custom_call.1} parent=5 // pred_check
        _
      $region38: #{tpu_custom_call.1} parent=5 // pred_check_branch
        %254 = sbr.rel (%p251) target = $region40
      $region39: #{tpu_custom_call.1} parent=5 // pred_region
        %s255 = ssub.s32 %s16, 1
        %s256 = smul.u32 16, %s25
        %p257 = scmp.lt.s32.totalorder %s256, 31
        %s258 = scalar_select %p257, %s256, 31
        %s259 = smul.addr %s258, 8
        %s260 = scalar_lea.vmem %s0, %s259
        %p261 = pneg %p54
        %p262 = pneg %p51
        %p263 = pneg %p75
        %p264 = pneg %p72
        %p265 = pneg %p96
        %p266 = pneg %p93
        %p267 = scmp.lt.s32.totalorder %s26, 0
        %s268 = scalar_select %p267, %s26, 0
        %s269 = smul.addr %s268, 4
        %s270 = scalar_lea.vmem %s3, %s269
        %p271 = pneg %p122
        %p272 = pneg %p119
        %p273 = scmp.lt.s32.totalorder %s26, 0
        %s274 = scalar_select %p273, %s26, 0
        %s275 = scalar_lea.vmem %s4, %s274
        %p276 = pneg %p148
        %p277 = pneg %p145
        %p278 = pneg %p176
        %p279 = pneg %p173
        %s280 = sand.u32 %s163, 1
        %s281 = scalar_lea.sflag [#allocation6], %s280
        %s282 = sand.u32 %s163, 1
        %s283 = smul.addr %s282, 128
        %s284 = scalar_lea.vmem [#allocation5], %s283
        %p285 = pneg %p202
        %p286 = pneg %p199
        %s287 = smul.u32 16, %s25
        %p288 = scmp.lt.s32.totalorder %s287, 31
        %s289 = scalar_select %p288, %s287, 31
        %s290 = smul.addr %s289, 8
        %s291 = scalar_lea.vmem %s6, %s290
        %s292 = smul.u32 16, %s25
        %p293 = scmp.lt.s32.totalorder %s292, 31
        %s294 = scalar_select %p293, %s292, 31
        %s295 = smul.addr %s294, 8
        %s296 = scalar_lea.vmem %s0, %s295
        %s297 = smul.u32 16, %s25
        %p298 = scmp.lt.s32.totalorder %s26, 0
        %s299 = scalar_select %p298, %s26, 0
        %s300 = smul.addr %s299, 4
        %s301 = scalar_lea.vmem %s3, %s300
        %p302 = scmp.lt.s32.totalorder %s26, 0
        %s303 = scalar_select %p302, %s26, 0
        %s304 = scalar_lea.vmem %s4, %s303
        %s305 = smul.u32 16, %s25
        %s306 = smul.u32 16, %s25
        %p307 = scmp.lt.s32.totalorder %s306, 31
        %s308 = scalar_select %p307, %s306, 31
        %s309 = smul.addr %s308, 8
        %s310 = scalar_lea.vmem %s6, %s309
        %s311 = smul.u32 16, %s25
        %p313 = scmp.eq.s32.totalorder %s26, 0
        // Predicated region
        $region41: #{tpu_custom_call.1} parent=39 // pred_check
          %p314 = pneg %p313
        $region42: #{tpu_custom_call.1} parent=39 // pred_check_branch
          %316 = sbr.rel (%p314) target = $region44
        $region43: #{tpu_custom_call.1} parent=39 // pred_region
          %v317 = vld [vmem:[%s296] sm:$0xff]
          %v318 = vld [vmem:[%s296 + $0x8] sm:$0xff]
          %v319 = vld [vmem:[%s296 + $0x10] sm:$0xff]
          %v320 = vld [vmem:[%s296 + $0x18] sm:$0xff]
          %v321 = vld [vmem:[%s296 + $0x20] sm:$0xff]
          %v322 = vld [vmem:[%s296 + $0x28] sm:$0xff]
          %v323 = vld [vmem:[%s296 + $0x30] sm:$0xff]
          %v324 = vld [vmem:[%s296 + $0x38] sm:$0xff]
          %v325 = vld [vmem:[%s296 + $0x40] sm:$0xff]
          %v326 = vld [vmem:[%s296 + $0x48] sm:$0xff]
          %v327 = vld [vmem:[%s296 + $0x50] sm:$0xff]
          %v328 = vld [vmem:[%s296 + $0x58] sm:$0xff]
          %v329 = vld [vmem:[%s296 + $0x60] sm:$0xff]
          %v330 = vld [vmem:[%s296 + $0x68] sm:$0xff]
          %v331 = vld [vmem:[%s296 + $0x70] sm:$0xff]
          %v332 = vld [vmem:[%s296 + $0x78] sm:$0xff]
          %v333 = vlaneseq
          %v334 = vand.u32 %v333, 127
          %v335 = vadd.s32 %v334, 128
          %336 = vset.pattern.permute.xlu0 0
          %337 = vperm.xlu0 %336, %v317
          %v338 = vpop.permute.xlu0 %337
          %339 = vset.pattern.permute.xlu0 0
          %340 = vperm.xlu0 %339, %v318
          %v341 = vpop.permute.xlu0 %340
          %342 = vset.pattern.permute.xlu0 0
          %343 = vperm.xlu0 %342, %v319
          %v344 = vpop.permute.xlu0 %343
          %345 = vset.pattern.permute.xlu0 0
          %346 = vperm.xlu0 %345, %v320
          %v347 = vpop.permute.xlu0 %346
          %348 = vset.pattern.permute.xlu0 0
          %349 = vperm.xlu0 %348, %v321
          %v350 = vpop.permute.xlu0 %349
          %351 = vset.pattern.permute.xlu0 0
          %352 = vperm.xlu0 %351, %v322
          %v353 = vpop.permute.xlu0 %352
          %354 = vset.pattern.permute.xlu0 0
          %355 = vperm.xlu0 %354, %v323
          %v356 = vpop.permute.xlu0 %355
          %357 = vset.pattern.permute.xlu0 0
          %358 = vperm.xlu0 %357, %v324
          %v359 = vpop.permute.xlu0 %358
          %360 = vset.pattern.permute.xlu0 0
          %361 = vperm.xlu0 %360, %v325
          %v362 = vpop.permute.xlu0 %361
          %363 = vset.pattern.permute.xlu0 0
          %364 = vperm.xlu0 %363, %v326
          %v365 = vpop.permute.xlu0 %364
          %366 = vset.pattern.permute.xlu0 0
          %367 = vperm.xlu0 %366, %v327
          %v368 = vpop.permute.xlu0 %367
          %369 = vset.pattern.permute.xlu0 0
          %370 = vperm.xlu0 %369, %v328
          %v371 = vpop.permute.xlu0 %370
          %372 = vset.pattern.permute.xlu0 0
          %373 = vperm.xlu0 %372, %v329
          %v374 = vpop.permute.xlu0 %373
          %375 = vset.pattern.permute.xlu0 0
          %376 = vperm.xlu0 %375, %v330
          %v377 = vpop.permute.xlu0 %376
          %378 = vset.pattern.permute.xlu0 0
          %379 = vperm.xlu0 %378, %v331
          %v380 = vpop.permute.xlu0 %379
          %381 = vset.pattern.permute.xlu0 0
          %382 = vperm.xlu0 %381, %v332
          %v383 = vpop.permute.xlu0 %382
          %vm384 = vcmp.eq.s32.totalorder %v334, %v338
          %vm385 = vcmp.eq.s32.totalorder %v335, %v338
          %vm386 = vcmp.eq.s32.totalorder %v334, %v341
          %vm387 = vcmp.eq.s32.totalorder %v335, %v341
          %vm388 = vcmp.eq.s32.totalorder %v334, %v344
          %vm389 = vcmp.eq.s32.totalorder %v335, %v344
          %vm390 = vcmp.eq.s32.totalorder %v334, %v347
          %vm391 = vcmp.eq.s32.totalorder %v335, %v347
          %vm392 = vcmp.eq.s32.totalorder %v334, %v350
          %vm393 = vcmp.eq.s32.totalorder %v335, %v350
          %vm394 = vcmp.eq.s32.totalorder %v334, %v353
          %vm395 = vcmp.eq.s32.totalorder %v335, %v353
          %vm396 = vcmp.eq.s32.totalorder %v334, %v356
          %vm397 = vcmp.eq.s32.totalorder %v335, %v356
          %vm398 = vcmp.eq.s32.totalorder %v334, %v359
          %vm399 = vcmp.eq.s32.totalorder %v335, %v359
          %vm400 = vcmp.eq.s32.totalorder %v334, %v362
          %vm401 = vcmp.eq.s32.totalorder %v335, %v362
          %vm402 = vcmp.eq.s32.totalorder %v334, %v365
          %vm403 = vcmp.eq.s32.totalorder %v335, %v365
          %vm404 = vcmp.eq.s32.totalorder %v334, %v368
          %vm405 = vcmp.eq.s32.totalorder %v335, %v368
          %vm406 = vcmp.eq.s32.totalorder %v334, %v371
          %vm407 = vcmp.eq.s32.totalorder %v335, %v371
          %vm408 = vcmp.eq.s32.totalorder %v334, %v374
          %vm409 = vcmp.eq.s32.totalorder %v335, %v374
          %vm410 = vcmp.eq.s32.totalorder %v334, %v377
          %vm411 = vcmp.eq.s32.totalorder %v335, %v377
          %vm412 = vcmp.eq.s32.totalorder %v334, %v380
          %vm413 = vcmp.eq.s32.totalorder %v335, %v380
          %vm414 = vcmp.eq.s32.totalorder %v334, %v383
          %vm415 = vcmp.eq.s32.totalorder %v335, %v383
          %v416 = vadd.s32 %v317, 128
          %v417 = vadd.s32 %v318, 128
          %v418 = vadd.s32 %v319, 128
          %v419 = vadd.s32 %v320, 128
          %v420 = vadd.s32 %v321, 128
          %v421 = vadd.s32 %v322, 128
          %v422 = vadd.s32 %v323, 128
          %v423 = vadd.s32 %v324, 128
          %v424 = vadd.s32 %v325, 128
          %v425 = vadd.s32 %v326, 128
          %v426 = vadd.s32 %v327, 128
          %v427 = vadd.s32 %v328, 128
          %v428 = vadd.s32 %v329, 128
          %v429 = vadd.s32 %v330, 128
          %v430 = vadd.s32 %v331, 128
          %v431 = vadd.s32 %v332, 128
          %432 = vset.pattern.permute.xlu0 1
          %433 = vperm.xlu0 %432, %v416
          %v434 = vpop.permute.xlu0 %433
          %435 = vset.pattern.permute.xlu0 1
          %436 = vperm.xlu0 %435, %v417
          %v437 = vpop.permute.xlu0 %436
          %438 = vset.pattern.permute.xlu0 1
          %439 = vperm.xlu0 %438, %v418
          %v440 = vpop.permute.xlu0 %439
          %441 = vset.pattern.permute.xlu0 1
          %442 = vperm.xlu0 %441, %v419
          %v443 = vpop.permute.xlu0 %442
          %444 = vset.pattern.permute.xlu0 1
          %445 = vperm.xlu0 %444, %v420
          %v446 = vpop.permute.xlu0 %445
          %447 = vset.pattern.permute.xlu0 1
          %448 = vperm.xlu0 %447, %v421
          %v449 = vpop.permute.xlu0 %448
          %450 = vset.pattern.permute.xlu0 1
          %451 = vperm.xlu0 %450, %v422
          %v452 = vpop.permute.xlu0 %451
          %453 = vset.pattern.permute.xlu0 1
          %454 = vperm.xlu0 %453, %v423
          %v455 = vpop.permute.xlu0 %454
          %456 = vset.pattern.permute.xlu0 1
          %457 = vperm.xlu0 %456, %v424
          %v458 = vpop.permute.xlu0 %457
          %459 = vset.pattern.permute.xlu0 1
          %460 = vperm.xlu0 %459, %v425
          %v461 = vpop.permute.xlu0 %460
          %462 = vset.pattern.permute.xlu0 1
          %463 = vperm.xlu0 %462, %v426
          %v464 = vpop.permute.xlu0 %463
          %465 = vset.pattern.permute.xlu0 1
          %466 = vperm.xlu0 %465, %v427
          %v467 = vpop.permute.xlu0 %466
          %468 = vset.pattern.permute.xlu0 1
          %469 = vperm.xlu0 %468, %v428
          %v470 = vpop.permute.xlu0 %469
          %471 = vset.pattern.permute.xlu0 1
          %472 = vperm.xlu0 %471, %v429
          %v473 = vpop.permute.xlu0 %472
          %474 = vset.pattern.permute.xlu0 1
          %475 = vperm.xlu0 %474, %v430
          %v476 = vpop.permute.xlu0 %475
          %477 = vset.pattern.permute.xlu0 1
          %478 = vperm.xlu0 %477, %v431
          %v479 = vpop.permute.xlu0 %478
          %vm480 = vcmp.eq.s32.totalorder %v334, %v434
          %vm481 = vcmp.eq.s32.totalorder %v335, %v434
          %vm482 = vcmp.eq.s32.totalorder %v334, %v437
          %vm483 = vcmp.eq.s32.totalorder %v335, %v437
          %vm484 = vcmp.eq.s32.totalorder %v334, %v440
          %vm485 = vcmp.eq.s32.totalorder %v335, %v440
          %vm486 = vcmp.eq.s32.totalorder %v334, %v443
          %vm487 = vcmp.eq.s32.totalorder %v335, %v443
          %vm488 = vcmp.eq.s32.totalorder %v334, %v446
          %vm489 = vcmp.eq.s32.totalorder %v335, %v446
          %vm490 = vcmp.eq.s32.totalorder %v334, %v449
          %vm491 = vcmp.eq.s32.totalorder %v335, %v449
          %vm492 = vcmp.eq.s32.totalorder %v334, %v452
          %vm493 = vcmp.eq.s32.totalorder %v335, %v452
          %vm494 = vcmp.eq.s32.totalorder %v334, %v455
          %vm495 = vcmp.eq.s32.totalorder %v335, %v455
          %vm496 = vcmp.eq.s32.totalorder %v334, %v458
          %vm497 = vcmp.eq.s32.totalorder %v335, %v458
          %vm498 = vcmp.eq.s32.totalorder %v334, %v461
          %vm499 = vcmp.eq.s32.totalorder %v335, %v461
          %vm500 = vcmp.eq.s32.totalorder %v334, %v464
          %vm501 = vcmp.eq.s32.totalorder %v335, %v464
          %vm502 = vcmp.eq.s32.totalorder %v334, %v467
          %vm503 = vcmp.eq.s32.totalorder %v335, %v467
          %vm504 = vcmp.eq.s32.totalorder %v334, %v470
          %vm505 = vcmp.eq.s32.totalorder %v335, %v470
          %vm506 = vcmp.eq.s32.totalorder %v334, %v473
          %vm507 = vcmp.eq.s32.totalorder %v335, %v473
          %vm508 = vcmp.eq.s32.totalorder %v334, %v476
          %vm509 = vcmp.eq.s32.totalorder %v335, %v476
          %vm510 = vcmp.eq.s32.totalorder %v334, %v479
          %vm511 = vcmp.eq.s32.totalorder %v335, %v479
          %vm512 = vmor %vm384, %vm480
          %vm513 = vmor %vm385, %vm481
          %vm514 = vmor %vm386, %vm482
          %vm515 = vmor %vm387, %vm483
          %vm516 = vmor %vm388, %vm484
          %vm517 = vmor %vm389, %vm485
          %vm518 = vmor %vm390, %vm486
          %vm519 = vmor %vm391, %vm487
          %vm520 = vmor %vm392, %vm488
          %vm521 = vmor %vm393, %vm489
          %vm522 = vmor %vm394, %vm490
          %vm523 = vmor %vm395, %vm491
          %vm524 = vmor %vm396, %vm492
          %vm525 = vmor %vm397, %vm493
          %vm526 = vmor %vm398, %vm494
          %vm527 = vmor %vm399, %vm495
          %vm528 = vmor %vm400, %vm496
          %vm529 = vmor %vm401, %vm497
          %vm530 = vmor %vm402, %vm498
          %vm531 = vmor %vm403, %vm499
          %vm532 = vmor %vm404, %vm500
          %vm533 = vmor %vm405, %vm501
          %vm534 = vmor %vm406, %vm502
          %vm535 = vmor %vm407, %vm503
          %vm536 = vmor %vm408, %vm504
          %vm537 = vmor %vm409, %vm505
          %vm538 = vmor %vm410, %vm506
          %vm539 = vmor %vm411, %vm507
          %vm540 = vmor %vm412, %vm508
          %vm541 = vmor %vm413, %vm509
          %vm542 = vmor %vm414, %vm510
          %vm543 = vmor %vm415, %vm511
          %v544 = vsel %vm512, 1, 0
          %v545 = vsel %vm513, 1, 0
          %v546 = vsel %vm514, 1, 0
          %v547 = vsel %vm515, 1, 0
          %v548 = vsel %vm516, 1, 0
          %v549 = vsel %vm517, 1, 0
          %v550 = vsel %vm518, 1, 0
          %v551 = vsel %vm519, 1, 0
          %v552 = vsel %vm520, 1, 0
          %v553 = vsel %vm521, 1, 0
          %v554 = vsel %vm522, 1, 0
          %v555 = vsel %vm523, 1, 0
          %v556 = vsel %vm524, 1, 0
          %v557 = vsel %vm525, 1, 0
          %v558 = vsel %vm526, 1, 0
          %v559 = vsel %vm527, 1, 0
          %v560 = vsel %vm528, 1, 0
          %v561 = vsel %vm529, 1, 0
          %v562 = vsel %vm530, 1, 0
          %v563 = vsel %vm531, 1, 0
          %v564 = vsel %vm532, 1, 0
          %v565 = vsel %vm533, 1, 0
          %v566 = vsel %vm534, 1, 0
          %v567 = vsel %vm535, 1, 0
          %v568 = vsel %vm536, 1, 0
          %v569 = vsel %vm537, 1, 0
          %v570 = vsel %vm538, 1, 0
          %v571 = vsel %vm539, 1, 0
          %v572 = vsel %vm540, 1, 0
          %v573 = vsel %vm541, 1, 0
          %v574 = vsel %vm542, 1, 0
          %v575 = vsel %vm543, 1, 0
          %v576 = vcvt.s32.f32 %v544
          %v577 = vcvt.s32.f32 %v545
          %v578 = vcvt.s32.f32 %v546
          %v579 = vcvt.s32.f32 %v547
          %v580 = vcvt.s32.f32 %v548
          %v581 = vcvt.s32.f32 %v549
          %v582 = vcvt.s32.f32 %v550
          %v583 = vcvt.s32.f32 %v551
          %v584 = vcvt.s32.f32 %v552
          %v585 = vcvt.s32.f32 %v553
          %v586 = vcvt.s32.f32 %v554
          %v587 = vcvt.s32.f32 %v555
          %v588 = vcvt.s32.f32 %v556
          %v589 = vcvt.s32.f32 %v557
          %v590 = vcvt.s32.f32 %v558
          %v591 = vcvt.s32.f32 %v559
          %v592 = vcvt.s32.f32 %v560
          %v593 = vcvt.s32.f32 %v561
          %v594 = vcvt.s32.f32 %v562
          %v595 = vcvt.s32.f32 %v563
          %v596 = vcvt.s32.f32 %v564
          %v597 = vcvt.s32.f32 %v565
          %v598 = vcvt.s32.f32 %v566
          %v599 = vcvt.s32.f32 %v567
          %v600 = vcvt.s32.f32 %v568
          %v601 = vcvt.s32.f32 %v569
          %v602 = vcvt.s32.f32 %v570
          %v603 = vcvt.s32.f32 %v571
          %v604 = vcvt.s32.f32 %v572
          %v605 = vcvt.s32.f32 %v573
          %v606 = vcvt.s32.f32 %v574
          %v607 = vcvt.s32.f32 %v575
          %v608 = vpack.c.bf16 %v578, %v576
          %v609 = vpack.c.bf16 %v579, %v577
          %v610 = vpack.c.bf16 %v582, %v580
          %v611 = vpack.c.bf16 %v583, %v581
          %v612 = vpack.c.bf16 %v586, %v584
          %v613 = vpack.c.bf16 %v587, %v585
          %v614 = vpack.c.bf16 %v590, %v588
          %v615 = vpack.c.bf16 %v591, %v589
          %v616 = vpack.c.bf16 %v594, %v592
          %v617 = vpack.c.bf16 %v595, %v593
          %v618 = vpack.c.bf16 %v598, %v596
          %v619 = vpack.c.bf16 %v599, %v597
          %v620 = vpack.c.bf16 %v602, %v600
          %v621 = vpack.c.bf16 %v603, %v601
          %v622 = vpack.c.bf16 %v606, %v604
          %v623 = vpack.c.bf16 %v607, %v605
          %v624 = vld [vmem:[%s1] sm:$0xf]
          %v625 = vld [vmem:[%s1 + $0x4] sm:$0xf]
          %v626 = vld [vmem:[%s1 + $0x8] sm:$0xf]
          %v627 = vld [vmem:[%s1 + $0xc] sm:$0xf]
          %v628 = vld [vmem:[%s1 + $0x10] sm:$0xf]
          %v629 = vld [vmem:[%s1 + $0x14] sm:$0xf]
          %v630 = vld [vmem:[%s1 + $0x18] sm:$0xf]
          %v631 = vld [vmem:[%s1 + $0x1c] sm:$0xf]
          %v632 = vld [vmem:[%s1 + $0x20] sm:$0xf]
          %v633 = vld [vmem:[%s1 + $0x24] sm:$0xf]
          %v634 = vld [vmem:[%s1 + $0x28] sm:$0xf]
          %v635 = vld [vmem:[%s1 + $0x2c] sm:$0xf]
          %v636 = vld [vmem:[%s1 + $0x30] sm:$0xf]
          %v637 = vld [vmem:[%s1 + $0x34] sm:$0xf]
          %v638 = vld [vmem:[%s1 + $0x38] sm:$0xf]
          %v639 = vld [vmem:[%s1 + $0x3c] sm:$0xf]
          %v640 = vld [vmem:[%s1 + $0x40] sm:$0xf]
          %v641 = vld [vmem:[%s1 + $0x44] sm:$0xf]
          %v642 = vld [vmem:[%s1 + $0x48] sm:$0xf]
          %v643 = vld [vmem:[%s1 + $0x4c] sm:$0xf]
          %v644 = vld [vmem:[%s1 + $0x50] sm:$0xf]
          %v645 = vld [vmem:[%s1 + $0x54] sm:$0xf]
          %v646 = vld [vmem:[%s1 + $0x58] sm:$0xf]
          %v647 = vld [vmem:[%s1 + $0x5c] sm:$0xf]
          %v648 = vld [vmem:[%s1 + $0x60] sm:$0xf]
          %v649 = vld [vmem:[%s1 + $0x64] sm:$0xf]
          %v650 = vld [vmem:[%s1 + $0x68] sm:$0xf]
          %v651 = vld [vmem:[%s1 + $0x6c] sm:$0xf]
          %v652 = vld [vmem:[%s1 + $0x70] sm:$0xf]
          %v653 = vld [vmem:[%s1 + $0x74] sm:$0xf]
          %v654 = vld [vmem:[%s1 + $0x78] sm:$0xf]
          %v655 = vld [vmem:[%s1 + $0x7c] sm:$0xf]
          %v656 = vld [vmem:[%s2] sm:$0x1]
          %v658 = vlaneseq
          %v659 = vshrl.u32 %v658, 7
          %v660 = vsub.s32 0, %v659
          %v661 = vrot.slane %v656, %v660
          %v695 = vunpack.c.l.b16 %v624
          %v696 = vunpack.c.l.b16 %v625
          %v697 = vunpack.c.l.b16 %v626
          %v698 = vunpack.c.l.b16 %v627
          %v699 = vunpack.c.l.b16 %v628
          %v700 = vunpack.c.l.b16 %v629
          %v701 = vunpack.c.l.b16 %v630
          %v702 = vunpack.c.l.b16 %v631
          %v703 = vunpack.c.l.b16 %v632
          %v704 = vunpack.c.l.b16 %v633
          %v705 = vunpack.c.l.b16 %v634
          %v706 = vunpack.c.l.b16 %v635
          %v707 = vunpack.c.l.b16 %v636
          %v708 = vunpack.c.l.b16 %v637
          %v709 = vunpack.c.l.b16 %v638
          %v710 = vunpack.c.l.b16 %v639
          %v711 = vunpack.c.l.b16 %v640
          %v712 = vunpack.c.l.b16 %v641
          %v713 = vunpack.c.l.b16 %v642
          %v714 = vunpack.c.l.b16 %v643
          %v715 = vunpack.c.l.b16 %v644
          %v716 = vunpack.c.l.b16 %v645
          %v717 = vunpack.c.l.b16 %v646
          %v718 = vunpack.c.l.b16 %v647
          %v719 = vunpack.c.l.b16 %v648
          %v720 = vunpack.c.l.b16 %v649
          %v721 = vunpack.c.l.b16 %v650
          %v722 = vunpack.c.l.b16 %v651
          %v723 = vunpack.c.l.b16 %v652
          %v724 = vunpack.c.l.b16 %v653
          %v725 = vunpack.c.l.b16 %v654
          %v726 = vunpack.c.l.b16 %v655
          %v727 = vpack.c.b16 %v696, %v695
          %v728 = vpack.c.b16 %v698, %v697
          %v729 = vpack.c.b16 %v700, %v699
          %v730 = vpack.c.b16 %v702, %v701
          %v731 = vpack.c.b16 %v704, %v703
          %v732 = vpack.c.b16 %v706, %v705
          %v733 = vpack.c.b16 %v708, %v707
          %v734 = vpack.c.b16 %v710, %v709
          %v735 = vpack.c.b16 %v712, %v711
          %v736 = vpack.c.b16 %v714, %v713
          %v737 = vpack.c.b16 %v716, %v715
          %v738 = vpack.c.b16 %v718, %v717
          %v739 = vpack.c.b16 %v720, %v719
          %v740 = vpack.c.b16 %v722, %v721
          %v741 = vpack.c.b16 %v724, %v723
          %v742 = vpack.c.b16 %v726, %v725
          %759 = vmatprep.subr.bf16.mxu0 0
          %760 = vmatpush1.bf16.msra.mxu0 %v734
          %761 = vmatprep.subr.bf16.mxu0 0
          %762 = vmatpush1.bf16.msra.mxu0 %v733
          %763 = vmatprep.subr.bf16.mxu0 0
          %764 = vmatpush1.bf16.msra.mxu0 %v732
          %765 = vmatprep.subr.bf16.mxu0 0
          %766 = vmatpush1.bf16.msra.mxu0 %v731
          %767 = vmatprep.subr.bf16.mxu0 0
          %768 = vmatpush1.bf16.msra.mxu0 %v730
          %769 = vmatprep.subr.bf16.mxu0 0
          %770 = vmatpush1.bf16.msra.mxu0 %v729
          %771 = vmatprep.subr.bf16.mxu0 0
          %772 = vmatpush1.bf16.msra.mxu0 %v728
          %773 = vmatprep.subr.bf16.mxu0 0
          %774 = vmatpush1.bf16.msra.mxu0 %v727
          %775 = vmatprep.subr.bf16.mxu0 0
          %776 = vmatpush2.bf16.msra.mxu0 %v742
          %777 = vmatprep.subr.bf16.mxu0 0
          %778 = vmatpush2.bf16.msra.mxu0 %v741
          %779 = vmatprep.subr.bf16.mxu0 0
          %780 = vmatpush2.bf16.msra.mxu0 %v740
          %781 = vmatprep.subr.bf16.mxu0 0
          %782 = vmatpush2.bf16.msra.mxu0 %v739
          %783 = vmatprep.subr.bf16.mxu0 0
          %784 = vmatpush2.bf16.msra.mxu0 %v738
          %785 = vmatprep.subr.bf16.mxu0 0
          %786 = vmatpush2.bf16.msra.mxu0 %v737
          %787 = vmatprep.subr.bf16.mxu0 0
          %788 = vmatpush2.bf16.msra.mxu0 %v736
          %789 = vmatprep.subr.bf16.mxu0 0
          %790 = vmatpush2.bf16.msra.mxu0 %v735
          %791 = vmatprep.mubr.bf16.mxu0 %v609
          %792 = vmatmul.mubr.bf16.gmra.mxu0 %v608
          %v793 = vpop.f32.mrf.mxu0
          %v794 = vadd.f32 %v661, %v793
          %v795 = vpop.f32.mrf.mxu0
          %v796 = vpop.f32.mrf.mxu0
          %v797 = vadd.f32 %v661, %v796
          %v798 = vpop.f32.mrf.mxu0
          %799 = vmatprep.mubr.bf16.mxu0 %v611
          %800 = vmatmul.mubr.bf16.gmra.mxu0 %v610
          %v801 = vpop.f32.mrf.mxu0
          %v802 = vadd.f32 %v661, %v801
          %v803 = vpop.f32.mrf.mxu0
          %v804 = vpop.f32.mrf.mxu0
          %v805 = vadd.f32 %v661, %v804
          %v806 = vpop.f32.mrf.mxu0
          %807 = vmatprep.mubr.bf16.mxu0 %v613
          %808 = vmatmul.mubr.bf16.gmra.mxu0 %v612
          %v809 = vpop.f32.mrf.mxu0
          %v810 = vadd.f32 %v661, %v809
          %v811 = vpop.f32.mrf.mxu0
          %v812 = vpop.f32.mrf.mxu0
          %v813 = vadd.f32 %v661, %v812
          %v814 = vpop.f32.mrf.mxu0
          %815 = vmatprep.mubr.bf16.mxu0 %v615
          %816 = vmatmul.mubr.bf16.gmra.mxu0 %v614
          %v817 = vpop.f32.mrf.mxu0
          %v818 = vadd.f32 %v661, %v817
          %v819 = vpop.f32.mrf.mxu0
          %v820 = vpop.f32.mrf.mxu0
          %v821 = vadd.f32 %v661, %v820
          %v822 = vpop.f32.mrf.mxu0
          %823 = vmatprep.mubr.bf16.mxu0 %v617
          %824 = vmatmul.mubr.bf16.gmra.mxu0 %v616
          %v825 = vpop.f32.mrf.mxu0
          %v826 = vadd.f32 %v661, %v825
          %v827 = vpop.f32.mrf.mxu0
          %v828 = vpop.f32.mrf.mxu0
          %v829 = vadd.f32 %v661, %v828
          %v830 = vpop.f32.mrf.mxu0
          %831 = vmatprep.mubr.bf16.mxu0 %v619
          %832 = vmatmul.mubr.bf16.gmra.mxu0 %v618
          %v833 = vpop.f32.mrf.mxu0
          %v834 = vadd.f32 %v661, %v833
          %v835 = vpop.f32.mrf.mxu0
          %v836 = vpop.f32.mrf.mxu0
          %v837 = vadd.f32 %v661, %v836
          %v838 = vpop.f32.mrf.mxu0
          %839 = vmatprep.mubr.bf16.mxu0 %v621
          %840 = vmatmul.mubr.bf16.gmra.mxu0 %v620
          %v841 = vpop.f32.mrf.mxu0
          %v842 = vadd.f32 %v661, %v841
          %v843 = vpop.f32.mrf.mxu0
          %v844 = vpop.f32.mrf.mxu0
          %v845 = vadd.f32 %v661, %v844
          %v846 = vpop.f32.mrf.mxu0
          %847 = vmatprep.mubr.bf16.mxu0 %v623
          %848 = vmatmul.mubr.bf16.gmra.mxu0 %v622
          %v849 = vpop.f32.mrf.mxu0
          %v850 = vadd.f32 %v661, %v849
          %v851 = vpop.f32.mrf.mxu0
          %v852 = vpop.f32.mrf.mxu0
          %v853 = vadd.f32 %v661, %v852
          %v854 = vpop.f32.mrf.mxu0
          %855 = vdwg.mxu0
          %v856 = vmax.f32 %v794, 0.0
          %v857 = vmax.f32 %v797, 0.0
          %v858 = vmax.f32 %v802, 0.0
          %v859 = vmax.f32 %v805, 0.0
          %v860 = vmax.f32 %v810, 0.0
          %v861 = vmax.f32 %v813, 0.0
          %v862 = vmax.f32 %v818, 0.0
          %v863 = vmax.f32 %v821, 0.0
          %v864 = vmax.f32 %v826, 0.0
          %v865 = vmax.f32 %v829, 0.0
          %v866 = vmax.f32 %v834, 0.0
          %v867 = vmax.f32 %v837, 0.0
          %v868 = vmax.f32 %v842, 0.0
          %v869 = vmax.f32 %v845, 0.0
          %v870 = vmax.f32 %v850, 0.0
          %v871 = vmax.f32 %v853, 0.0
          %v872 = vpack.c.bf16 %v857, %v856
          %v873 = vpack.c.bf16 %v859, %v858
          %v874 = vpack.c.bf16 %v861, %v860
          %v875 = vpack.c.bf16 %v863, %v862
          %v876 = vpack.c.bf16 %v865, %v864
          %v877 = vpack.c.bf16 %v867, %v866
          %v878 = vpack.c.bf16 %v869, %v868
          %v879 = vpack.c.bf16 %v871, %v870
          %v888 = vunpack.c.l.b16 %v872
          %v889 = vunpack.c.h.b16 %v872
          %v890 = vunpack.c.l.b16 %v873
          %v891 = vunpack.c.h.b16 %v873
          %v892 = vunpack.c.l.b16 %v874
          %v893 = vunpack.c.h.b16 %v874
          %v894 = vunpack.c.l.b16 %v875
          %v895 = vunpack.c.h.b16 %v875
          %v896 = vunpack.c.l.b16 %v876
          %v897 = vunpack.c.h.b16 %v876
          %v898 = vunpack.c.l.b16 %v877
          %v899 = vunpack.c.h.b16 %v877
          %v900 = vunpack.c.l.b16 %v878
          %v901 = vunpack.c.h.b16 %v878
          %v902 = vunpack.c.l.b16 %v879
          %v903 = vunpack.c.h.b16 %v879
          %v904 = vpack.c.b16 %v888, %v888
          %v905 = vpack.c.b16 %v889, %v889
          %v906 = vpack.c.b16 %v890, %v890
          %v907 = vpack.c.b16 %v891, %v891
          %v908 = vpack.c.b16 %v892, %v892
          %v909 = vpack.c.b16 %v893, %v893
          %v910 = vpack.c.b16 %v894, %v894
          %v911 = vpack.c.b16 %v895, %v895
          %v912 = vpack.c.b16 %v896, %v896
          %v913 = vpack.c.b16 %v897, %v897
          %v914 = vpack.c.b16 %v898, %v898
          %v915 = vpack.c.b16 %v899, %v899
          %v916 = vpack.c.b16 %v900, %v900
          %v917 = vpack.c.b16 %v901, %v901
          %v918 = vpack.c.b16 %v902, %v902
          %v919 = vpack.c.b16 %v903, %v903
          %936 = vst [vmem:[#allocation2] sm:$0xf] %v904
          %937 = vst [vmem:[#allocation2 + $0x4] sm:$0xf] %v905
          %938 = vst [vmem:[#allocation2 + $0x8] sm:$0xf] %v906
          %939 = vst [vmem:[#allocation2 + $0xc] sm:$0xf] %v907
          %940 = vst [vmem:[#allocation2 + $0x10] sm:$0xf] %v908
          %941 = vst [vmem:[#allocation2 + $0x14] sm:$0xf] %v909
          %942 = vst [vmem:[#allocation2 + $0x18] sm:$0xf] %v910
          %943 = vst [vmem:[#allocation2 + $0x1c] sm:$0xf] %v911
          %944 = vst [vmem:[#allocation2 + $0x20] sm:$0xf] %v912
          %945 = vst [vmem:[#allocation2 + $0x24] sm:$0xf] %v913
          %946 = vst [vmem:[#allocation2 + $0x28] sm:$0xf] %v914
          %947 = vst [vmem:[#allocation2 + $0x2c] sm:$0xf] %v915
          %948 = vst [vmem:[#allocation2 + $0x30] sm:$0xf] %v916
          %949 = vst [vmem:[#allocation2 + $0x34] sm:$0xf] %v917
          %950 = vst [vmem:[#allocation2 + $0x38] sm:$0xf] %v918
          %951 = vst [vmem:[#allocation2 + $0x3c] sm:$0xf] %v919
          %vm952 = vcmask 7168
          %953 = vst.msk [vmem:[#allocation3] sm:$0xff] %vm952, -inf
          %954 = vst.msk [vmem:[#allocation3 + $0x8] sm:$0xff] %vm952, -inf
          %955 = vst.msk [vmem:[#allocation3 + $0x10] sm:$0xff] %vm952, -inf
          %956 = vst.msk [vmem:[#allocation3 + $0x18] sm:$0xff] %vm952, -inf
          %957 = vst.msk [vmem:[#allocation3 + $0x20] sm:$0xff] %vm952, -inf
          %958 = vst.msk [vmem:[#allocation3 + $0x28] sm:$0xff] %vm952, -inf
          %959 = vst.msk [vmem:[#allocation3 + $0x30] sm:$0xff] %vm952, -inf
          %960 = vst.msk [vmem:[#allocation3 + $0x38] sm:$0xff] %vm952, -inf
          %961 = vst.msk [vmem:[#allocation3 + $0x40] sm:$0xff] %vm952, -inf
          %962 = vst.msk [vmem:[#allocation3 + $0x48] sm:$0xff] %vm952, -inf
          %963 = vst.msk [vmem:[#allocation3 + $0x50] sm:$0xff] %vm952, -inf
          %964 = vst.msk [vmem:[#allocation3 + $0x58] sm:$0xff] %vm952, -inf
          %965 = vst.msk [vmem:[#allocation3 + $0x60] sm:$0xff] %vm952, -inf
          %966 = vst.msk [vmem:[#allocation3 + $0x68] sm:$0xff] %vm952, -inf
          %967 = vst.msk [vmem:[#allocation3 + $0x70] sm:$0xff] %vm952, -inf
          %968 = vst.msk [vmem:[#allocation3 + $0x78] sm:$0xff] %vm952, -inf
          %969 = vst.msk [vmem:[#allocation4] sm:$0xff] %vm952, 0.0
          %970 = vst.msk [vmem:[#allocation4 + $0x8] sm:$0xff] %vm952, 0.0
          %971 = vst.msk [vmem:[#allocation4 + $0x10] sm:$0xff] %vm952, 0.0
          %972 = vst.msk [vmem:[#allocation4 + $0x18] sm:$0xff] %vm952, 0.0
          %973 = vst.msk [vmem:[#allocation4 + $0x20] sm:$0xff] %vm952, 0.0
          %974 = vst.msk [vmem:[#allocation4 + $0x28] sm:$0xff] %vm952, 0.0
          %975 = vst.msk [vmem:[#allocation4 + $0x30] sm:$0xff] %vm952, 0.0
          %976 = vst.msk [vmem:[#allocation4 + $0x38] sm:$0xff] %vm952, 0.0
          %977 = vst.msk [vmem:[#allocation4 + $0x40] sm:$0xff] %vm952, 0.0
          %978 = vst.msk [vmem:[#allocation4 + $0x48] sm:$0xff] %vm952, 0.0
          %979 = vst.msk [vmem:[#allocation4 + $0x50] sm:$0xff] %vm952, 0.0
          %980 = vst.msk [vmem:[#allocation4 + $0x58] sm:$0xff] %vm952, 0.0
          %981 = vst.msk [vmem:[#allocation4 + $0x60] sm:$0xff] %vm952, 0.0
          %982 = vst.msk [vmem:[#allocation4 + $0x68] sm:$0xff] %vm952, 0.0
          %983 = vst.msk [vmem:[#allocation4 + $0x70] sm:$0xff] %vm952, 0.0
          %984 = vst.msk [vmem:[#allocation4 + $0x78] sm:$0xff] %vm952, 0.0
        $region44: #{tpu_custom_call.1} parent=39 // pred_fallthru
          _
        %v985 = vld [vmem:[#allocation2] sm:$0xf]
        %v986 = vld [vmem:[#allocation2 + $0x4] sm:$0xf]
        %v987 = vld [vmem:[#allocation2 + $0x8] sm:$0xf]
        %v988 = vld [vmem:[#allocation2 + $0xc] sm:$0xf]
        %v989 = vld [vmem:[#allocation2 + $0x10] sm:$0xf]
        %v990 = vld [vmem:[#allocation2 + $0x14] sm:$0xf]
        %v991 = vld [vmem:[#allocation2 + $0x18] sm:$0xf]
        %v992 = vld [vmem:[#allocation2 + $0x1c] sm:$0xf]
        %v993 = vld [vmem:[#allocation2 + $0x20] sm:$0xf]
        %v994 = vld [vmem:[#allocation2 + $0x24] sm:$0xf]
        %v995 = vld [vmem:[#allocation2 + $0x28] sm:$0xf]
        %v996 = vld [vmem:[#allocation2 + $0x2c] sm:$0xf]
        %v997 = vld [vmem:[#allocation2 + $0x30] sm:$0xf]
        %v998 = vld [vmem:[#allocation2 + $0x34] sm:$0xf]
        %v999 = vld [vmem:[#allocation2 + $0x38] sm:$0xf]
        %v1000 = vld [vmem:[#allocation2 + $0x3c] sm:$0xf]
        %v1001 = vld [vmem:[%s301] sm:$0xf]
        %v1002 = vld [vmem:[%s301 + $0x4] sm:$0xf]
        %v1003 = vld [vmem:[%s301 + $0x8] sm:$0xf]
        %v1004 = vld [vmem:[%s301 + $0xc] sm:$0xf]
        %v1005 = vld [vmem:[%s301 + $0x10] sm:$0xf]
        %v1006 = vld [vmem:[%s301 + $0x14] sm:$0xf]
        %v1007 = vld [vmem:[%s301 + $0x18] sm:$0xf]
        %v1008 = vld [vmem:[%s301 + $0x1c] sm:$0xf]
        %v1009 = vld [vmem:[%s301 + $0x20] sm:$0xf]
        %v1010 = vld [vmem:[%s301 + $0x24] sm:$0xf]
        %v1011 = vld [vmem:[%s301 + $0x28] sm:$0xf]
        %v1012 = vld [vmem:[%s301 + $0x2c] sm:$0xf]
        %v1013 = vld [vmem:[%s301 + $0x30] sm:$0xf]
        %v1014 = vld [vmem:[%s301 + $0x34] sm:$0xf]
        %v1015 = vld [vmem:[%s301 + $0x38] sm:$0xf]
        %v1016 = vld [vmem:[%s301 + $0x3c] sm:$0xf]
        %v1017 = vld [vmem:[%s304] sm:$0x1]
        %v1019 = vlaneseq
        %v1020 = vshrl.u32 %v1019, 7
        %v1021 = vsub.s32 0, %v1020
        %v1022 = vrot.slane %v1017, %v1021
        %v1040 = vunpack.c.l.b16 %v985
        %v1041 = vunpack.c.l.b16 %v986
        %v1042 = vunpack.c.l.b16 %v987
        %v1043 = vunpack.c.l.b16 %v988
        %v1044 = vunpack.c.l.b16 %v989
        %v1045 = vunpack.c.l.b16 %v990
        %v1046 = vunpack.c.l.b16 %v991
        %v1047 = vunpack.c.l.b16 %v992
        %v1048 = vunpack.c.l.b16 %v993
        %v1049 = vunpack.c.l.b16 %v994
        %v1050 = vunpack.c.l.b16 %v995
        %v1051 = vunpack.c.l.b16 %v996
        %v1052 = vunpack.c.l.b16 %v997
        %v1053 = vunpack.c.l.b16 %v998
        %v1054 = vunpack.c.l.b16 %v999
        %v1055 = vunpack.c.l.b16 %v1000
        %v1056 = vpack.c.b16 %v1041, %v1040
        %v1057 = vpack.c.b16 %v1043, %v1042
        %v1058 = vpack.c.b16 %v1045, %v1044
        %v1059 = vpack.c.b16 %v1047, %v1046
        %v1060 = vpack.c.b16 %v1049, %v1048
        %v1061 = vpack.c.b16 %v1051, %v1050
        %v1062 = vpack.c.b16 %v1053, %v1052
        %v1063 = vpack.c.b16 %v1055, %v1054
        %v1088 = vunpack.c.l.b16 %v1001
        %v1089 = vunpack.c.l.b16 %v1002
        %v1090 = vunpack.c.l.b16 %v1003
        %v1091 = vunpack.c.l.b16 %v1004
        %v1092 = vunpack.c.l.b16 %v1005
        %v1093 = vunpack.c.l.b16 %v1006
        %v1094 = vunpack.c.l.b16 %v1007
        %v1095 = vunpack.c.l.b16 %v1008
        %v1096 = vunpack.c.l.b16 %v1009
        %v1097 = vunpack.c.l.b16 %v1010
        %v1098 = vunpack.c.l.b16 %v1011
        %v1099 = vunpack.c.l.b16 %v1012
        %v1100 = vunpack.c.l.b16 %v1013
        %v1101 = vunpack.c.l.b16 %v1014
        %v1102 = vunpack.c.l.b16 %v1015
        %v1103 = vunpack.c.l.b16 %v1016
        %v1104 = vpack.c.b16 %v1089, %v1088
        %v1105 = vpack.c.b16 %v1091, %v1090
        %v1106 = vpack.c.b16 %v1093, %v1092
        %v1107 = vpack.c.b16 %v1095, %v1094
        %v1108 = vpack.c.b16 %v1097, %v1096
        %v1109 = vpack.c.b16 %v1099, %v1098
        %v1110 = vpack.c.b16 %v1101, %v1100
        %v1111 = vpack.c.b16 %v1103, %v1102
        %1120 = vmatprep.subr.bf16.mxu0 0
        %1121 = vmatpush1.bf16.msra.mxu0 %v1111
        %1122 = vmatprep.subr.bf16.mxu0 0
        %1123 = vmatpush1.bf16.msra.mxu0 %v1110
        %1124 = vmatprep.subr.bf16.mxu0 0
        %1125 = vmatpush1.bf16.msra.mxu0 %v1109
        %1126 = vmatprep.subr.bf16.mxu0 0
        %1127 = vmatpush1.bf16.msra.mxu0 %v1108
        %1128 = vmatprep.subr.bf16.mxu0 0
        %1129 = vmatpush1.bf16.msra.mxu0 %v1107
        %1130 = vmatprep.subr.bf16.mxu0 0
        %1131 = vmatpush1.bf16.msra.mxu0 %v1106
        %1132 = vmatprep.subr.bf16.mxu0 0
        %1133 = vmatpush1.bf16.msra.mxu0 %v1105
        %1134 = vmatprep.subr.bf16.mxu0 0
        %1135 = vmatpush1.bf16.msra.mxu0 %v1104
        %1136 = vmatprep.subr.bf16.mxu0 0
        %1137 = vmatpush2.bf16.msra.mxu0 0
        %1138 = vmatprep.subr.bf16.mxu0 0
        %1139 = vmatpush2.bf16.msra.mxu0 0
        %1140 = vmatprep.subr.bf16.mxu0 0
        %1141 = vmatpush2.bf16.msra.mxu0 0
        %1142 = vmatprep.subr.bf16.mxu0 0
        %1143 = vmatpush2.bf16.msra.mxu0 0
        %1144 = vmatprep.subr.bf16.mxu0 0
        %1145 = vmatpush2.bf16.msra.mxu0 0
        %1146 = vmatprep.subr.bf16.mxu0 0
        %1147 = vmatpush2.bf16.msra.mxu0 0
        %1148 = vmatprep.subr.bf16.mxu0 0
        %1149 = vmatpush2.bf16.msra.mxu0 0
        %1150 = vmatprep.subr.bf16.mxu0 0
        %1151 = vmatpush2.bf16.msra.mxu0 0
        %1152 = vmatprep.mubr.bf16.mxu0 0
        %1153 = vmatmul.mubr.bf16.gmra.mxu0 %v1056
        %v1154 = vpop.f32.mrf.mxu0
        %v1155 = vadd.f32 %v1022, %v1154
        %v1156 = vpop.f32.mrf.mxu0
        %v1157 = vpop.f32.mrf.mxu0
        %v1158 = vadd.f32 %v1022, %v1157
        %v1159 = vpop.f32.mrf.mxu0
        %1160 = vmatprep.mubr.bf16.mxu0 0
        %1161 = vmatmul.mubr.bf16.gmra.mxu0 %v1057
        %v1162 = vpop.f32.mrf.mxu0
        %v1163 = vadd.f32 %v1022, %v1162
        %v1164 = vpop.f32.mrf.mxu0
        %v1165 = vpop.f32.mrf.mxu0
        %v1166 = vadd.f32 %v1022, %v1165
        %v1167 = vpop.f32.mrf.mxu0
        %1168 = vmatprep.mubr.bf16.mxu0 0
        %1169 = vmatmul.mubr.bf16.gmra.mxu0 %v1058
        %v1170 = vpop.f32.mrf.mxu0
        %v1171 = vadd.f32 %v1022, %v1170
        %v1172 = vpop.f32.mrf.mxu0
        %v1173 = vpop.f32.mrf.mxu0
        %v1174 = vadd.f32 %v1022, %v1173
        %v1175 = vpop.f32.mrf.mxu0
        %1176 = vmatprep.mubr.bf16.mxu0 0
        %1177 = vmatmul.mubr.bf16.gmra.mxu0 %v1059
        %v1178 = vpop.f32.mrf.mxu0
        %v1179 = vadd.f32 %v1022, %v1178
        %v1180 = vpop.f32.mrf.mxu0
        %v1181 = vpop.f32.mrf.mxu0
        %v1182 = vadd.f32 %v1022, %v1181
        %v1183 = vpop.f32.mrf.mxu0
        %1184 = vmatprep.mubr.bf16.mxu0 0
        %1185 = vmatmul.mubr.bf16.gmra.mxu0 %v1060
        %v1186 = vpop.f32.mrf.mxu0
        %v1187 = vadd.f32 %v1022, %v1186
        %v1188 = vpop.f32.mrf.mxu0
        %v1189 = vpop.f32.mrf.mxu0
        %v1190 = vadd.f32 %v1022, %v1189
        %v1191 = vpop.f32.mrf.mxu0
        %1192 = vmatprep.mubr.bf16.mxu0 0
        %1193 = vmatmul.mubr.bf16.gmra.mxu0 %v1061
        %v1194 = vpop.f32.mrf.mxu0
        %v1195 = vadd.f32 %v1022, %v1194
        %v1196 = vpop.f32.mrf.mxu0
        %v1197 = vpop.f32.mrf.mxu0
        %v1198 = vadd.f32 %v1022, %v1197
        %v1199 = vpop.f32.mrf.mxu0
        %1200 = vmatprep.mubr.bf16.mxu0 0
        %1201 = vmatmul.mubr.bf16.gmra.mxu0 %v1062
        %v1202 = vpop.f32.mrf.mxu0
        %v1203 = vadd.f32 %v1022, %v1202
        %v1204 = vpop.f32.mrf.mxu0
        %v1205 = vpop.f32.mrf.mxu0
        %v1206 = vadd.f32 %v1022, %v1205
        %v1207 = vpop.f32.mrf.mxu0
        %1208 = vmatprep.mubr.bf16.mxu0 0
        %1209 = vmatmul.mubr.bf16.gmra.mxu0 %v1063
        %v1210 = vpop.f32.mrf.mxu0
        %v1211 = vadd.f32 %v1022, %v1210
        %v1212 = vpop.f32.mrf.mxu0
        %v1213 = vpop.f32.mrf.mxu0
        %v1214 = vadd.f32 %v1022, %v1213
        %v1215 = vpop.f32.mrf.mxu0
        %1216 = vdwg.mxu0
        %1217 = vst [vmem:[%s284] sm:$0xff] %v1155
        %1218 = vst [vmem:[%s284 + $0x8] sm:$0xff] %v1158
        %1219 = vst [vmem:[%s284 + $0x10] sm:$0xff] %v1163
        %1220 = vst [vmem:[%s284 + $0x18] sm:$0xff] %v1166
        %1221 = vst [vmem:[%s284 + $0x20] sm:$0xff] %v1171
        %1222 = vst [vmem:[%s284 + $0x28] sm:$0xff] %v1174
        %1223 = vst [vmem:[%s284 + $0x30] sm:$0xff] %v1179
        %1224 = vst [vmem:[%s284 + $0x38] sm:$0xff] %v1182
        %1225 = vst [vmem:[%s284 + $0x40] sm:$0xff] %v1187
        %1226 = vst [vmem:[%s284 + $0x48] sm:$0xff] %v1190
        %1227 = vst [vmem:[%s284 + $0x50] sm:$0xff] %v1195
        %1228 = vst [vmem:[%s284 + $0x58] sm:$0xff] %v1198
        %1229 = vst [vmem:[%s284 + $0x60] sm:$0xff] %v1203
        %1230 = vst [vmem:[%s284 + $0x68] sm:$0xff] %v1206
        %1231 = vst [vmem:[%s284 + $0x70] sm:$0xff] %v1211
        %1232 = vst [vmem:[%s284 + $0x78] sm:$0xff] %v1214
        %v1233 = vld [vmem:[#allocation3] sm:$0xff]
        %v1234 = vld [vmem:[#allocation3 + $0x8] sm:$0xff]
        %v1235 = vld [vmem:[#allocation3 + $0x10] sm:$0xff]
        %v1236 = vld [vmem:[#allocation3 + $0x18] sm:$0xff]
        %v1237 = vld [vmem:[#allocation3 + $0x20] sm:$0xff]
        %v1238 = vld [vmem:[#allocation3 + $0x28] sm:$0xff]
        %v1239 = vld [vmem:[#allocation3 + $0x30] sm:$0xff]
        %v1240 = vld [vmem:[#allocation3 + $0x38] sm:$0xff]
        %v1241 = vld [vmem:[#allocation3 + $0x40] sm:$0xff]
        %v1242 = vld [vmem:[#allocation3 + $0x48] sm:$0xff]
        %v1243 = vld [vmem:[#allocation3 + $0x50] sm:$0xff]
        %v1244 = vld [vmem:[#allocation3 + $0x58] sm:$0xff]
        %v1245 = vld [vmem:[#allocation3 + $0x60] sm:$0xff]
        %v1246 = vld [vmem:[#allocation3 + $0x68] sm:$0xff]
        %v1247 = vld [vmem:[#allocation3 + $0x70] sm:$0xff]
        %v1248 = vld [vmem:[#allocation3 + $0x78] sm:$0xff]
        %1249 = vmax.xlane.f32.xlu0 %v1155
        %v1250 = vpop.xlane.xlu0 %1249
        %1251 = vmax.xlane.f32.xlu0 %v1158
        %v1252 = vpop.xlane.xlu0 %1251
        %1253 = vmax.xlane.f32.xlu0 %v1163
        %v1254 = vpop.xlane.xlu0 %1253
        %1255 = vmax.xlane.f32.xlu0 %v1166
        %v1256 = vpop.xlane.xlu0 %1255
        %1257 = vmax.xlane.f32.xlu0 %v1171
        %v1258 = vpop.xlane.xlu0 %1257
        %1259 = vmax.xlane.f32.xlu0 %v1174
        %v1260 = vpop.xlane.xlu0 %1259
        %1261 = vmax.xlane.f32.xlu0 %v1179
        %v1262 = vpop.xlane.xlu0 %1261
        %1263 = vmax.xlane.f32.xlu0 %v1182
        %v1264 = vpop.xlane.xlu0 %1263
        %1265 = vmax.xlane.f32.xlu0 %v1187
        %v1266 = vpop.xlane.xlu0 %1265
        %1267 = vmax.xlane.f32.xlu0 %v1190
        %v1268 = vpop.xlane.xlu0 %1267
        %1269 = vmax.xlane.f32.xlu0 %v1195
        %v1270 = vpop.xlane.xlu0 %1269
        %1271 = vmax.xlane.f32.xlu0 %v1198
        %v1272 = vpop.xlane.xlu0 %1271
        %1273 = vmax.xlane.f32.xlu0 %v1203
        %v1274 = vpop.xlane.xlu0 %1273
        %1275 = vmax.xlane.f32.xlu0 %v1206
        %v1276 = vpop.xlane.xlu0 %1275
        %1277 = vmax.xlane.f32.xlu0 %v1211
        %v1278 = vpop.xlane.xlu0 %1277
        %1279 = vmax.xlane.f32.xlu0 %v1214
        %v1280 = vpop.xlane.xlu0 %1279
        %v1281 = vmax.f32 %v1233, %v1250
        %v1282 = vmax.f32 %v1234, %v1252
        %v1283 = vmax.f32 %v1235, %v1254
        %v1284 = vmax.f32 %v1236, %v1256
        %v1285 = vmax.f32 %v1237, %v1258
        %v1286 = vmax.f32 %v1238, %v1260
        %v1287 = vmax.f32 %v1239, %v1262
        %v1288 = vmax.f32 %v1240, %v1264
        %v1289 = vmax.f32 %v1241, %v1266
        %v1290 = vmax.f32 %v1242, %v1268
        %v1291 = vmax.f32 %v1243, %v1270
        %v1292 = vmax.f32 %v1244, %v1272
        %v1293 = vmax.f32 %v1245, %v1274
        %v1294 = vmax.f32 %v1246, %v1276
        %v1295 = vmax.f32 %v1247, %v1278
        %v1296 = vmax.f32 %v1248, %v1280
        %v1297 = vld [vmem:[#allocation4] sm:$0xff]
        %v1298 = vld [vmem:[#allocation4 + $0x8] sm:$0xff]
        %v1299 = vld [vmem:[#allocation4 + $0x10] sm:$0xff]
        %v1300 = vld [vmem:[#allocation4 + $0x18] sm:$0xff]
        %v1301 = vld [vmem:[#allocation4 + $0x20] sm:$0xff]
        %v1302 = vld [vmem:[#allocation4 + $0x28] sm:$0xff]
        %v1303 = vld [vmem:[#allocation4 + $0x30] sm:$0xff]
        %v1304 = vld [vmem:[#allocation4 + $0x38] sm:$0xff]
        %v1305 = vld [vmem:[#allocation4 + $0x40] sm:$0xff]
        %v1306 = vld [vmem:[#allocation4 + $0x48] sm:$0xff]
        %v1307 = vld [vmem:[#allocation4 + $0x50] sm:$0xff]
        %v1308 = vld [vmem:[#allocation4 + $0x58] sm:$0xff]
        %v1309 = vld [vmem:[#allocation4 + $0x60] sm:$0xff]
        %v1310 = vld [vmem:[#allocation4 + $0x68] sm:$0xff]
        %v1311 = vld [vmem:[#allocation4 + $0x70] sm:$0xff]
        %v1312 = vld [vmem:[#allocation4 + $0x78] sm:$0xff]
        %v1313 = vsub.f32 %v1233, %v1281
        %v1314 = vsub.f32 %v1234, %v1282
        %v1315 = vsub.f32 %v1235, %v1283
        %v1316 = vsub.f32 %v1236, %v1284
        %v1317 = vsub.f32 %v1237, %v1285
        %v1318 = vsub.f32 %v1238, %v1286
        %v1319 = vsub.f32 %v1239, %v1287
        %v1320 = vsub.f32 %v1240, %v1288
        %v1321 = vsub.f32 %v1241, %v1289
        %v1322 = vsub.f32 %v1242, %v1290
        %v1323 = vsub.f32 %v1243, %v1291
        %v1324 = vsub.f32 %v1244, %v1292
        %v1325 = vsub.f32 %v1245, %v1293
        %v1326 = vsub.f32 %v1246, %v1294
        %v1327 = vsub.f32 %v1247, %v1295
        %v1328 = vsub.f32 %v1248, %v1296
        %v1329 = vmul.f32 %v1313, 1.442695
        %v1330 = vpow.pop %v1329
        %v1331 = vmul.f32 %v1314, 1.442695
        %v1332 = vpow.pop %v1331
        %v1333 = vmul.f32 %v1315, 1.442695
        %v1334 = vpow.pop %v1333
        %v1335 = vmul.f32 %v1316, 1.442695
        %v1336 = vpow.pop %v1335
        %v1337 = vmul.f32 %v1317, 1.442695
        %v1338 = vpow.pop %v1337
        %v1339 = vmul.f32 %v1318, 1.442695
        %v1340 = vpow.pop %v1339
        %v1341 = vmul.f32 %v1319, 1.442695
        %v1342 = vpow.pop %v1341
        %v1343 = vmul.f32 %v1320, 1.442695
        %v1344 = vpow.pop %v1343
        %v1345 = vmul.f32 %v1321, 1.442695
        %v1346 = vpow.pop %v1345
        %v1347 = vmul.f32 %v1322, 1.442695
        %v1348 = vpow.pop %v1347
        %v1349 = vmul.f32 %v1323, 1.442695
        %v1350 = vpow.pop %v1349
        %v1351 = vmul.f32 %v1324, 1.442695
        %v1352 = vpow.pop %v1351
        %v1353 = vmul.f32 %v1325, 1.442695
        %v1354 = vpow.pop %v1353
        %v1355 = vmul.f32 %v1326, 1.442695
        %v1356 = vpow.pop %v1355
        %v1357 = vmul.f32 %v1327, 1.442695
        %v1358 = vpow.pop %v1357
        %v1359 = vmul.f32 %v1328, 1.442695
        %v1360 = vpow.pop %v1359
        %v1361 = vmul.f32 %v1297, %v1330
        %v1362 = vmul.f32 %v1298, %v1332
        %v1363 = vmul.f32 %v1299, %v1334
        %v1364 = vmul.f32 %v1300, %v1336
        %v1365 = vmul.f32 %v1301, %v1338
        %v1366 = vmul.f32 %v1302, %v1340
        %v1367 = vmul.f32 %v1303, %v1342
        %v1368 = vmul.f32 %v1304, %v1344
        %v1369 = vmul.f32 %v1305, %v1346
        %v1370 = vmul.f32 %v1306, %v1348
        %v1371 = vmul.f32 %v1307, %v1350
        %v1372 = vmul.f32 %v1308, %v1352
        %v1373 = vmul.f32 %v1309, %v1354
        %v1374 = vmul.f32 %v1310, %v1356
        %v1375 = vmul.f32 %v1311, %v1358
        %v1376 = vmul.f32 %v1312, %v1360
        %1378 = vset.pattern.permute.xlu0 0
        %1379 = vperm.xlu0 %1378, %v1281
        %v1380 = vpop.permute.xlu0 %1379
        %1383 = vset.pattern.permute.xlu0 0
        %1384 = vperm.xlu0 %1383, %v1282
        %v1385 = vpop.permute.xlu0 %1384
        %1388 = vset.pattern.permute.xlu0 0
        %1389 = vperm.xlu0 %1388, %v1283
        %v1390 = vpop.permute.xlu0 %1389
        %1393 = vset.pattern.permute.xlu0 0
        %1394 = vperm.xlu0 %1393, %v1284
        %v1395 = vpop.permute.xlu0 %1394
        %1398 = vset.pattern.permute.xlu0 0
        %1399 = vperm.xlu0 %1398, %v1285
        %v1400 = vpop.permute.xlu0 %1399
        %1403 = vset.pattern.permute.xlu0 0
        %1404 = vperm.xlu0 %1403, %v1286
        %v1405 = vpop.permute.xlu0 %1404
        %1408 = vset.pattern.permute.xlu0 0
        %1409 = vperm.xlu0 %1408, %v1287
        %v1410 = vpop.permute.xlu0 %1409
        %1413 = vset.pattern.permute.xlu0 0
        %1414 = vperm.xlu0 %1413, %v1288
        %v1415 = vpop.permute.xlu0 %1414
        %1418 = vset.pattern.permute.xlu0 0
        %1419 = vperm.xlu0 %1418, %v1289
        %v1420 = vpop.permute.xlu0 %1419
        %1423 = vset.pattern.permute.xlu0 0
        %1424 = vperm.xlu0 %1423, %v1290
        %v1425 = vpop.permute.xlu0 %1424
        %1428 = vset.pattern.permute.xlu0 0
        %1429 = vperm.xlu0 %1428, %v1291
        %v1430 = vpop.permute.xlu0 %1429
        %1433 = vset.pattern.permute.xlu0 0
        %1434 = vperm.xlu0 %1433, %v1292
        %v1435 = vpop.permute.xlu0 %1434
        %1438 = vset.pattern.permute.xlu0 0
        %1439 = vperm.xlu0 %1438, %v1293
        %v1440 = vpop.permute.xlu0 %1439
        %1443 = vset.pattern.permute.xlu0 0
        %1444 = vperm.xlu0 %1443, %v1294
        %v1445 = vpop.permute.xlu0 %1444
        %1448 = vset.pattern.permute.xlu0 0
        %1449 = vperm.xlu0 %1448, %v1295
        %v1450 = vpop.permute.xlu0 %1449
        %1453 = vset.pattern.permute.xlu0 0
        %1454 = vperm.xlu0 %1453, %v1296
        %v1455 = vpop.permute.xlu0 %1454
        %v1457 = vsub.f32 %v1155, %v1380
        %v1458 = vsub.f32 %v1158, %v1385
        %v1459 = vsub.f32 %v1163, %v1390
        %v1460 = vsub.f32 %v1166, %v1395
        %v1461 = vsub.f32 %v1171, %v1400
        %v1462 = vsub.f32 %v1174, %v1405
        %v1463 = vsub.f32 %v1179, %v1410
        %v1464 = vsub.f32 %v1182, %v1415
        %v1465 = vsub.f32 %v1187, %v1420
        %v1466 = vsub.f32 %v1190, %v1425
        %v1467 = vsub.f32 %v1195, %v1430
        %v1468 = vsub.f32 %v1198, %v1435
        %v1469 = vsub.f32 %v1203, %v1440
        %v1470 = vsub.f32 %v1206, %v1445
        %v1471 = vsub.f32 %v1211, %v1450
        %v1472 = vsub.f32 %v1214, %v1455
        %v1473 = vmul.f32 %v1457, 1.442695
        %v1474 = vpow.pop %v1473
        %v1475 = vmul.f32 %v1458, 1.442695
        %v1476 = vpow.pop %v1475
        %v1477 = vmul.f32 %v1459, 1.442695
        %v1478 = vpow.pop %v1477
        %v1479 = vmul.f32 %v1460, 1.442695
        %v1480 = vpow.pop %v1479
        %v1481 = vmul.f32 %v1461, 1.442695
        %v1482 = vpow.pop %v1481
        %v1483 = vmul.f32 %v1462, 1.442695
        %v1484 = vpow.pop %v1483
        %v1485 = vmul.f32 %v1463, 1.442695
        %v1486 = vpow.pop %v1485
        %v1487 = vmul.f32 %v1464, 1.442695
        %v1488 = vpow.pop %v1487
        %v1489 = vmul.f32 %v1465, 1.442695
        %v1490 = vpow.pop %v1489
        %v1491 = vmul.f32 %v1466, 1.442695
        %v1492 = vpow.pop %v1491
        %v1493 = vmul.f32 %v1467, 1.442695
        %v1494 = vpow.pop %v1493
        %v1495 = vmul.f32 %v1468, 1.442695
        %v1496 = vpow.pop %v1495
        %v1497 = vmul.f32 %v1469, 1.442695
        %v1498 = vpow.pop %v1497
        %v1499 = vmul.f32 %v1470, 1.442695
        %v1500 = vpow.pop %v1499
        %v1501 = vmul.f32 %v1471, 1.442695
        %v1502 = vpow.pop %v1501
        %v1503 = vmul.f32 %v1472, 1.442695
        %v1504 = vpow.pop %v1503
        %1505 = vadd.xlane.f32.xlu0 %v1474
        %v1506 = vpop.xlane.xlu0 %1505
        %1507 = vadd.xlane.f32.xlu0 %v1476
        %v1508 = vpop.xlane.xlu0 %1507
        %1509 = vadd.xlane.f32.xlu0 %v1478
        %v1510 = vpop.xlane.xlu0 %1509
        %1511 = vadd.xlane.f32.xlu0 %v1480
        %v1512 = vpop.xlane.xlu0 %1511
        %1513 = vadd.xlane.f32.xlu0 %v1482
        %v1514 = vpop.xlane.xlu0 %1513
        %1515 = vadd.xlane.f32.xlu0 %v1484
        %v1516 = vpop.xlane.xlu0 %1515
        %1517 = vadd.xlane.f32.xlu0 %v1486
        %v1518 = vpop.xlane.xlu0 %1517
        %1519 = vadd.xlane.f32.xlu0 %v1488
        %v1520 = vpop.xlane.xlu0 %1519
        %1521 = vadd.xlane.f32.xlu0 %v1490
        %v1522 = vpop.xlane.xlu0 %1521
        %1523 = vadd.xlane.f32.xlu0 %v1492
        %v1524 = vpop.xlane.xlu0 %1523
        %1525 = vadd.xlane.f32.xlu0 %v1494
        %v1526 = vpop.xlane.xlu0 %1525
        %1527 = vadd.xlane.f32.xlu0 %v1496
        %v1528 = vpop.xlane.xlu0 %1527
        %1529 = vadd.xlane.f32.xlu0 %v1498
        %v1530 = vpop.xlane.xlu0 %1529
        %1531 = vadd.xlane.f32.xlu0 %v1500
        %v1532 = vpop.xlane.xlu0 %1531
        %1533 = vadd.xlane.f32.xlu0 %v1502
        %v1534 = vpop.xlane.xlu0 %1533
        %1535 = vadd.xlane.f32.xlu0 %v1504
        %v1536 = vpop.xlane.xlu0 %1535
        %v1537 = vadd.f32 %v1361, %v1506
        %v1538 = vadd.f32 %v1362, %v1508
        %v1539 = vadd.f32 %v1363, %v1510
        %v1540 = vadd.f32 %v1364, %v1512
        %v1541 = vadd.f32 %v1365, %v1514
        %v1542 = vadd.f32 %v1366, %v1516
        %v1543 = vadd.f32 %v1367, %v1518
        %v1544 = vadd.f32 %v1368, %v1520
        %v1545 = vadd.f32 %v1369, %v1522
        %v1546 = vadd.f32 %v1370, %v1524
        %v1547 = vadd.f32 %v1371, %v1526
        %v1548 = vadd.f32 %v1372, %v1528
        %v1549 = vadd.f32 %v1373, %v1530
        %v1550 = vadd.f32 %v1374, %v1532
        %v1551 = vadd.f32 %v1375, %v1534
        %v1552 = vadd.f32 %v1376, %v1536
        %vm1553 = vcmask 7168
        %1554 = vst.msk [vmem:[#allocation4] sm:$0xff] %vm1553, %v1537
        %1555 = vst.msk [vmem:[#allocation4 + $0x8] sm:$0xff] %vm1553, %v1538
        %1556 = vst.msk [vmem:[#allocation4 + $0x10] sm:$0xff] %vm1553, %v1539
        %1557 = vst.msk [vmem:[#allocation4 + $0x18] sm:$0xff] %vm1553, %v1540
        %1558 = vst.msk [vmem:[#allocation4 + $0x20] sm:$0xff] %vm1553, %v1541
        %1559 = vst.msk [vmem:[#allocation4 + $0x28] sm:$0xff] %vm1553, %v1542
        %1560 = vst.msk [vmem:[#allocation4 + $0x30] sm:$0xff] %vm1553, %v1543
        %1561 = vst.msk [vmem:[#allocation4 + $0x38] sm:$0xff] %vm1553, %v1544
        %1562 = vst.msk [vmem:[#allocation4 + $0x40] sm:$0xff] %vm1553, %v1545
        %1563 = vst.msk [vmem:[#allocation4 + $0x48] sm:$0xff] %vm1553, %v1546
        %1564 = vst.msk [vmem:[#allocation4 + $0x50] sm:$0xff] %vm1553, %v1547
        %1565 = vst.msk [vmem:[#allocation4 + $0x58] sm:$0xff] %vm1553, %v1548
        %1566 = vst.msk [vmem:[#allocation4 + $0x60] sm:$0xff] %vm1553, %v1549
        %1567 = vst.msk [vmem:[#allocation4 + $0x68] sm:$0xff] %vm1553, %v1550
        %1568 = vst.msk [vmem:[#allocation4 + $0x70] sm:$0xff] %vm1553, %v1551
        %1569 = vst.msk [vmem:[#allocation4 + $0x78] sm:$0xff] %vm1553, %v1552
        %1570 = vst.msk [vmem:[#allocation3] sm:$0xff] %vm1553, %v1281
        %1571 = vst.msk [vmem:[#allocation3 + $0x8] sm:$0xff] %vm1553, %v1282
        %1572 = vst.msk [vmem:[#allocation3 + $0x10] sm:$0xff] %vm1553, %v1283
        %1573 = vst.msk [vmem:[#allocation3 + $0x18] sm:$0xff] %vm1553, %v1284
        %1574 = vst.msk [vmem:[#allocation3 + $0x20] sm:$0xff] %vm1553, %v1285
        %1575 = vst.msk [vmem:[#allocation3 + $0x28] sm:$0xff] %vm1553, %v1286
        %1576 = vst.msk [vmem:[#allocation3 + $0x30] sm:$0xff] %vm1553, %v1287
        %1577 = vst.msk [vmem:[#allocation3 + $0x38] sm:$0xff] %vm1553, %v1288
        %1578 = vst.msk [vmem:[#allocation3 + $0x40] sm:$0xff] %vm1553, %v1289
        %1579 = vst.msk [vmem:[#allocation3 + $0x48] sm:$0xff] %vm1553, %v1290
        %1580 = vst.msk [vmem:[#allocation3 + $0x50] sm:$0xff] %vm1553, %v1291
        %1581 = vst.msk [vmem:[#allocation3 + $0x58] sm:$0xff] %vm1553, %v1292
        %1582 = vst.msk [vmem:[#allocation3 + $0x60] sm:$0xff] %vm1553, %v1293
        %1583 = vst.msk [vmem:[#allocation3 + $0x68] sm:$0xff] %vm1553, %v1294
        %1584 = vst.msk [vmem:[#allocation3 + $0x70] sm:$0xff] %vm1553, %v1295
        %1585 = vst.msk [vmem:[#allocation3 + $0x78] sm:$0xff] %vm1553, %v1296
        // Predicated region
        $region45: #{tpu_custom_call.1} parent=39 // pred_check
          %p1586 = pneg %p313
        $region46: #{tpu_custom_call.1} parent=39 // pred_check_branch
          %1588 = sbr.rel (%p1586) target = $region48
        $region47: #{tpu_custom_call.1} parent=39 // pred_region
          %v1589 = vld [vmem:[#allocation3] sm:$0xff]
          %v1590 = vld [vmem:[#allocation3 + $0x8] sm:$0xff]
          %v1591 = vld [vmem:[#allocation3 + $0x10] sm:$0xff]
          %v1592 = vld [vmem:[#allocation3 + $0x18] sm:$0xff]
          %v1593 = vld [vmem:[#allocation3 + $0x20] sm:$0xff]
          %v1594 = vld [vmem:[#allocation3 + $0x28] sm:$0xff]
          %v1595 = vld [vmem:[#allocation3 + $0x30] sm:$0xff]
          %v1596 = vld [vmem:[#allocation3 + $0x38] sm:$0xff]
          %v1597 = vld [vmem:[#allocation3 + $0x40] sm:$0xff]
          %v1598 = vld [vmem:[#allocation3 + $0x48] sm:$0xff]
          %v1599 = vld [vmem:[#allocation3 + $0x50] sm:$0xff]
          %v1600 = vld [vmem:[#allocation3 + $0x58] sm:$0xff]
          %v1601 = vld [vmem:[#allocation3 + $0x60] sm:$0xff]
          %v1602 = vld [vmem:[#allocation3 + $0x68] sm:$0xff]
          %v1603 = vld [vmem:[#allocation3 + $0x70] sm:$0xff]
          %v1604 = vld [vmem:[#allocation3 + $0x78] sm:$0xff]
          %v1605 = vld [vmem:[#allocation4] sm:$0xff]
          %v1606 = vld [vmem:[#allocation4 + $0x8] sm:$0xff]
          %v1607 = vld [vmem:[#allocation4 + $0x10] sm:$0xff]
          %v1608 = vld [vmem:[#allocation4 + $0x18] sm:$0xff]
          %v1609 = vld [vmem:[#allocation4 + $0x20] sm:$0xff]
          %v1610 = vld [vmem:[#allocation4 + $0x28] sm:$0xff]
          %v1611 = vld [vmem:[#allocation4 + $0x30] sm:$0xff]
          %v1612 = vld [vmem:[#allocation4 + $0x38] sm:$0xff]
          %v1613 = vld [vmem:[#allocation4 + $0x40] sm:$0xff]
          %v1614 = vld [vmem:[#allocation4 + $0x48] sm:$0xff]
          %v1615 = vld [vmem:[#allocation4 + $0x50] sm:$0xff]
          %v1616 = vld [vmem:[#allocation4 + $0x58] sm:$0xff]
          %v1617 = vld [vmem:[#allocation4 + $0x60] sm:$0xff]
          %v1618 = vld [vmem:[#allocation4 + $0x68] sm:$0xff]
          %v1619 = vld [vmem:[#allocation4 + $0x70] sm:$0xff]
          %v1620 = vld [vmem:[#allocation4 + $0x78] sm:$0xff]
          %v1621 = vlog2.pop %v1605
          %v1622 = vmul.f32 %v1621, 0.6931472
          %v1623 = vlog2.pop %v1606
          %v1624 = vmul.f32 %v1623, 0.6931472
          %v1625 = vlog2.pop %v1607
          %v1626 = vmul.f32 %v1625, 0.6931472
          %v1627 = vlog2.pop %v1608
          %v1628 = vmul.f32 %v1627, 0.6931472
          %v1629 = vlog2.pop %v1609
          %v1630 = vmul.f32 %v1629, 0.6931472
          %v1631 = vlog2.pop %v1610
          %v1632 = vmul.f32 %v1631, 0.6931472
          %v1633 = vlog2.pop %v1611
          %v1634 = vmul.f32 %v1633, 0.6931472
          %v1635 = vlog2.pop %v1612
          %v1636 = vmul.f32 %v1635, 0.6931472
          %v1637 = vlog2.pop %v1613
          %v1638 = vmul.f32 %v1637, 0.6931472
          %v1639 = vlog2.pop %v1614
          %v1640 = vmul.f32 %v1639, 0.6931472
          %v1641 = vlog2.pop %v1615
          %v1642 = vmul.f32 %v1641, 0.6931472
          %v1643 = vlog2.pop %v1616
          %v1644 = vmul.f32 %v1643, 0.6931472
          %v1645 = vlog2.pop %v1617
          %v1646 = vmul.f32 %v1645, 0.6931472
          %v1647 = vlog2.pop %v1618
          %v1648 = vmul.f32 %v1647, 0.6931472
          %v1649 = vlog2.pop %v1619
          %v1650 = vmul.f32 %v1649, 0.6931472
          %v1651 = vlog2.pop %v1620
          %v1652 = vmul.f32 %v1651, 0.6931472
          %v1653 = vadd.f32 %v1589, %v1622
          %v1654 = vadd.f32 %v1590, %v1624
          %v1655 = vadd.f32 %v1591, %v1626
          %v1656 = vadd.f32 %v1592, %v1628
          %v1657 = vadd.f32 %v1593, %v1630
          %v1658 = vadd.f32 %v1594, %v1632
          %v1659 = vadd.f32 %v1595, %v1634
          %v1660 = vadd.f32 %v1596, %v1636
          %v1661 = vadd.f32 %v1597, %v1638
          %v1662 = vadd.f32 %v1598, %v1640
          %v1663 = vadd.f32 %v1599, %v1642
          %v1664 = vadd.f32 %v1600, %v1644
          %v1665 = vadd.f32 %v1601, %v1646
          %v1666 = vadd.f32 %v1602, %v1648
          %v1667 = vadd.f32 %v1603, %v1650
          %v1668 = vadd.f32 %v1604, %v1652
          %1669 = vst.msk [vmem:[%s310] sm:$0xff] %vm1553, %v1653
          %1670 = vst.msk [vmem:[%s310 + $0x8] sm:$0xff] %vm1553, %v1654
          %1671 = vst.msk [vmem:[%s310 + $0x10] sm:$0xff] %vm1553, %v1655
          %1672 = vst.msk [vmem:[%s310 + $0x18] sm:$0xff] %vm1553, %v1656
          %1673 = vst.msk [vmem:[%s310 + $0x20] sm:$0xff] %vm1553, %v1657
          %1674 = vst.msk [vmem:[%s310 + $0x28] sm:$0xff] %vm1553, %v1658
          %1675 = vst.msk [vmem:[%s310 + $0x30] sm:$0xff] %vm1553, %v1659
          %1676 = vst.msk [vmem:[%s310 + $0x38] sm:$0xff] %vm1553, %v1660
          %1677 = vst.msk [vmem:[%s310 + $0x40] sm:$0xff] %vm1553, %v1661
          %1678 = vst.msk [vmem:[%s310 + $0x48] sm:$0xff] %vm1553, %v1662
          %1679 = vst.msk [vmem:[%s310 + $0x50] sm:$0xff] %vm1553, %v1663
          %1680 = vst.msk [vmem:[%s310 + $0x58] sm:$0xff] %vm1553, %v1664
          %1681 = vst.msk [vmem:[%s310 + $0x60] sm:$0xff] %vm1553, %v1665
          %1682 = vst.msk [vmem:[%s310 + $0x68] sm:$0xff] %vm1553, %v1666
          %1683 = vst.msk [vmem:[%s310 + $0x70] sm:$0xff] %vm1553, %v1667
          %1684 = vst.msk [vmem:[%s310 + $0x78] sm:$0xff] %vm1553, %v1668
        $region48: #{tpu_custom_call.1} parent=39 // pred_fallthru
          _
        %s1685 = sand.u32 %s163, 1
        %s1686 = scalar_lea.sflag [#allocation6], %s1685
        %s1687 = sand.u32 %s163, 1
        %s1688 = smul.addr %s1687, 128
        %s1689 = scalar_lea.vmem [#allocation5], %s1688
        %s1690 = smul.u32 16, %s25
        %p1691 = scmp.lt.s32.totalorder %s1690, 31
        %s1692 = scalar_select %p1691, %s1690, 31
        %s1693 = smul.addr %s1692, 8
        %s1694 = scalar_lea.vmem %s6, %s1693
        // Predicated region
        $region49: #{tpu_custom_call.1} parent=39 // pred_check
          %p1695 = pneg %p173
        $region50: #{tpu_custom_call.1} parent=39 // pred_check_branch
          %1697 = sbr.rel (%p1695) target = $region52
        $region51: #{tpu_custom_call.1} parent=39 // pred_region
          %s1698 = smul.u32 16, %s25
          %s1700 = ssub.s32 2048, 2048
          %1701 = vsyncadd %s1686, %s1700
          %s1702 = sadd.s32 %s26, %s1698
          %s1703 = smul.addr %s1702, 128
          %s1704 = scalar_lea.hbm %s5, %s1703
          %s1705 = sshll.u32 %s1689, 4
          %s1706 = int_to_ptr.vmem [resolvable:$true] %s1705
          %1711 = dma.vmem_to_hbm [thread:$0]  %s1706, 2048, %s1704, %s1686, 128, 128, 8
        $region52: #{tpu_custom_call.1} parent=39 // pred_fallthru
          _
        // Predicated region
        $region53: #{tpu_custom_call.1} parent=39 // pred_check
          %p1712 = pneg %p199
        $region54: #{tpu_custom_call.1} parent=39 // pred_check_branch
          %1714 = sbr.rel (%p1712) target = $region56
        $region55: #{tpu_custom_call.1} parent=39 // pred_region
          %s1715 = smul.u32 16, %s25
        $region56: #{tpu_custom_call.1} parent=39 // pred_fallthru
          _
      $region40: #{tpu_custom_call.1} parent=5 // pred_fallthru
        _
      %p1716 = scmp.le.s32.totalorder 2, %s16
      // Predicated region
      $region57: #{tpu_custom_call.1} parent=5 // pred_check
        %p1717 = pneg %p1716
      $region58: #{tpu_custom_call.1} parent=5 // pred_check_branch
        %1719 = sbr.rel (%p1717) target = $region60
      $region59: #{tpu_custom_call.1} parent=5 // pred_region
        %s1720 = ssub.s32 %s16, 2
        // Predicated region
        $region61: #{tpu_custom_call.1} parent=59 // pred_check
          %p1721 = pneg %p179
        $region62: #{tpu_custom_call.1} parent=59 // pred_check_branch
          %1723 = sbr.rel (%p1721) target = $region64
        $region63: #{tpu_custom_call.1} parent=59 // pred_region
          %s1724 = sand.u32 %s164, 1
          %s1725 = scalar_lea.sflag [#allocation6], %s1724
          %s1726 = sand.u32 %s164, 1
          %s1727 = smul.addr %s1726, 128
          %s1728 = scalar_lea.vmem [#allocation5], %s1727
          %1729 = dma.done %s1725, 2048
        $region64: #{tpu_custom_call.1} parent=59 // pred_fallthru
          _
        // Predicated region
        $region65: #{tpu_custom_call.1} parent=59 // pred_check
          %p1730 = pneg %p205
        $region66: #{tpu_custom_call.1} parent=59 // pred_check_branch
          %1732 = sbr.rel (%p1730) target = $region68
        $region67: #{tpu_custom_call.1} parent=59 // pred_region
          %s1733 = smul.u32 16, %s27
          %p1734 = scmp.lt.s32.totalorder %s1733, 31
          %s1735 = scalar_select %p1734, %s1733, 31
          %s1736 = smul.addr %s1735, 8
          %s1737 = scalar_lea.vmem %s6, %s1736
        $region68: #{tpu_custom_call.1} parent=59 // pred_fallthru
          _
      $region60: #{tpu_custom_call.1} parent=5 // pred_fallthru
        _
    $region6: #{tpu_custom_call.1} parent=1 // loop_footer
      %s20 = sadd.s32 1, %s16
    $region7: #{tpu_custom_call.1} parent=1 // loop_footer_branch
      %15 = sbr.rel target = $region3
    $region8: #{tpu_custom_call.1} parent=1 // loop_exit
      _
    %1738 = vsyncpa [#allocation6], 1
    %s1739 = scalar_lea.sflag [#allocation6], 1
    %1740 = vsyncpa %s1739, 1

</llo_original>
